<compile_context>
chip_gen: v5e
topology: v5e:2x2
jax: 0.10.0
libtpu: 0.0.40
codegen_flags: <defaults>
</compile_context>

<pallas_src>
import functools

import jax
import jax.numpy as jnp
from jax.experimental import pallas as pl
from jax.experimental.pallas import tpu as pltpu


# ---------------------------------------------------------------------------
# Fused bottleneck kernel (one batch image per grid step)
# ---------------------------------------------------------------------------
def _bottleneck_kernel(*refs, hw, stride, downsampling):
    h, w, ho, wo = hw
    if downsampling:
        (x_ref, w1_ref, b1_ref, w2_ref, b2_ref, w3_ref, b3_ref,
         wd_ref, bd_ref, o_ref, y1p_ref, slab_ref, stage_ref) = refs
    else:
        (x_ref, w1_ref, b1_ref, w2_ref, b2_ref, w3_ref, b3_ref,
         o_ref, y1p_ref, slab_ref, stage_ref) = refs
        wd_ref = bd_ref = None

    ch_in = x_ref.shape[-1]
    ch_mid = w1_ref.shape[-1]
    ch_out = w3_ref.shape[-1]
    cdt = w1_ref.dtype  # bf16 compute dtype for MXU operands

    # ---- stage 1: 1x1 conv (BN scale pre-folded into weights) + bias + ReLU ----
    x2d = x_ref[...].reshape(h * w, ch_in)        # layout-trivial (w % 8 == 0)
    y1 = jnp.dot(x2d.astype(cdt), w1_ref[...], preferred_element_type=jnp.float32)
    y1 = jnp.maximum(y1 + b1_ref[...], 0.0)

    # zero only the 1-px halo border (megacore-safe; interior rewritten below)
    y1p_ref[0:1, :, :] = jnp.zeros((1, w + 2, ch_mid), jnp.float32)
    y1p_ref[h + 1:h + 2, :, :] = jnp.zeros((1, w + 2, ch_mid), jnp.float32)
    y1p_ref[:, 0:1, :] = jnp.zeros((h + 2, 1, ch_mid), jnp.float32)
    y1p_ref[:, w + 1:w + 2, :] = jnp.zeros((h + 2, 1, ch_mid), jnp.float32)
    y1p_ref[1:h + 1, 1:w + 1, :] = y1.reshape(h, w, ch_mid)

    # ---- stage 2: 3x3 conv (stride, pad=1) as ONE fused K=9*ch_mid matmul ----
    # build the im2col slab in VMEM from 9 (strided) window reads of the halo
    for t in range(9):
        dh, dw = t // 3, t % 3
        if stride == 1:
            patch = y1p_ref[pl.ds(dh, ho), pl.ds(dw, wo), :]
        else:
            patch = y1p_ref[pl.ds(dh, ho, stride), pl.ds(dw, wo, stride), :]
        slab_ref[:, t * ch_mid:(t + 1) * ch_mid] = patch.reshape(ho * wo, ch_mid)
    y2 = jnp.dot(slab_ref[...].astype(cdt), w2_ref[...],
                 preferred_element_type=jnp.float32)
    y2 = jnp.maximum(y2 + b2_ref[...], 0.0)

    # ---- residual path ----
    if downsampling:
        if stride == 1:
            xs = x_ref[...]
        else:
            xs = x_ref[pl.ds(0, ho, stride), pl.ds(0, wo, stride), :]
        res = jnp.dot(xs.reshape(ho * wo, ch_in).astype(cdt), wd_ref[...],
                      preferred_element_type=jnp.float32) + bd_ref[...]
    else:
        res = x2d  # identity shortcut (requires ch_in == 4*places, stride == 1)

    # ---- stage 3: 1x1 conv + bias + residual add + ReLU ----
    y3 = jnp.dot(y2.astype(cdt), w3_ref[...], preferred_element_type=jnp.float32)
    y3 = jnp.maximum(y3 + b3_ref[...] + res, 0.0)          # (ho*wo, ch_out), f32

    # ---- lane-dense writeback: output block is (ho, wo*ch_out) ----
    # relayout (ho*wo, ch_out) -> (ho, wo*ch_out) through a small VMEM staging
    # buffer (strided row reads + per-column stores); the HBM layout and the
    # writeback DMA are fully lane-dense.
    stage_ref[...] = y3
    for ow in range(wo):
        o_ref[:, ow * ch_out:(ow + 1) * ch_out] = stage_ref[pl.ds(ow, ho, wo), :]


# ---------------------------------------------------------------------------
# Wrapper: layout prep (NCHW->NHWC), BN-scale folding, one fused pallas_call
# ---------------------------------------------------------------------------
def base_block_forward(x_nchw, params, *, stride, downsampling, expansion=4):
    n, cin, h, w = x_nchw.shape
    places = params["w1"].shape[0]
    p4 = places * expansion
    ho = (h + 2 - 3) // stride + 1
    wo = (w + 2 - 3) // stride + 1
    if not downsampling:
        assert stride == 1 and cin == p4, (
            "identity shortcut needs stride=1 and in_places == places*expansion")
    # layout-trivial in-kernel reshapes assume 8-aligned spatial widths
    assert h % 8 == 0 and w % 8 == 0 and wo % 8 == 0

    bf16 = jnp.bfloat16
    f32 = jnp.float32
    x_nhwc = jnp.transpose(x_nchw, (0, 2, 3, 1)).astype(f32)   # channels-last

    # host-side weight prep: matmul layouts + BN scale folded into the weights
    w1s = (params["w1"].reshape(places, cin).T * params["s1"][None, :]).astype(bf16)
    w2s = (jnp.transpose(params["w2"], (2, 3, 1, 0))           # (kh,kw,in,out)
           * params["s2"][None, None, None, :]
           ).reshape(9 * places, places).astype(bf16)          # im2col K layout
    w3s = (params["w3"].reshape(p4, places).T * params["s3"][None, :]).astype(bf16)
    b1 = params["b1"].reshape(1, places).astype(f32)
    b2 = params["b2"].reshape(1, places).astype(f32)
    b3 = params["b3"].reshape(1, p4).astype(f32)

    in_specs = [
        pl.BlockSpec((None, h, w, cin), lambda i: (i, 0, 0, 0)),
        pl.BlockSpec((cin, places), lambda i: (0, 0)),
        pl.BlockSpec((1, places), lambda i: (0, 0)),
        pl.BlockSpec((9 * places, places), lambda i: (0, 0)),
        pl.BlockSpec((1, places), lambda i: (0, 0)),
        pl.BlockSpec((places, p4), lambda i: (0, 0)),
        pl.BlockSpec((1, p4), lambda i: (0, 0)),
    ]
    operands = [x_nhwc, w1s, b1, w2s, b2, w3s, b3]
    if downsampling:
        wds = (params["wd"].reshape(p4, cin).T * params["sd"][None, :]).astype(bf16)
        bd = params["bd"].reshape(1, p4).astype(f32)
        in_specs += [pl.BlockSpec((cin, p4), lambda i: (0, 0)),
                     pl.BlockSpec((1, p4), lambda i: (0, 0))]
        operands += [wds, bd]

    out = pl.pallas_call(
        functools.partial(_bottleneck_kernel, hw=(h, w, ho, wo),
                          stride=stride, downsampling=downsampling),
        out_shape=jax.ShapeDtypeStruct((n, ho, wo * p4), f32),  # lane-dense slab
        grid=(n,),   # one image per step; batch >= 8 gives real pipeline depth
        in_specs=in_specs,
        out_specs=pl.BlockSpec((None, ho, wo * p4), lambda i: (i, 0, 0)),
        scratch_shapes=[pltpu.VMEM((h + 2, w + 2, places), f32),   # padded y1
                        pltpu.VMEM((ho * wo, 9 * places), f32),    # im2col slab
                        pltpu.VMEM((ho * wo, p4), f32)],           # out staging
        compiler_params=pltpu.CompilerParams(dimension_semantics=("parallel",)),
    )(*operands)

    out = out.reshape(n, ho, wo, p4)                 # free wrapper-side reshape
    return jnp.transpose(out, (0, 3, 1, 2))          # back to NCHW


# ---------------------------------------------------------------------------
# Parameter init (folded inference-mode BN) and pure-JAX reference
# ---------------------------------------------------------------------------
def fold_bn(gamma, beta, mean, var, eps=1e-5):
    scale = gamma / jnp.sqrt(var + eps)
    bias = beta - mean * scale
    return scale, bias


def init_params(key, in_places, places, expansion, downsampling):
    p4 = places * expansion
    keys = jax.random.split(key, 20)
    ki = iter(range(20))

    def conv_w(shape):
        fan_in = shape[1] * shape[2] * shape[3]
        return jax.random.normal(keys[next(ki)], shape, jnp.float32) / jnp.sqrt(fan_in)

    def bn_params(c):
        gamma = jax.random.uniform(keys[next(ki)], (c,), jnp.float32, 0.5, 1.5)
        beta = 0.1 * jax.random.normal(keys[next(ki)], (c,), jnp.float32)
        mean = 0.1 * jax.random.normal(keys[next(ki)], (c,), jnp.float32)
        var = jax.random.uniform(keys[next(ki)], (c,), jnp.float32, 0.5, 1.5)
        return fold_bn(gamma, beta, mean, var)

    params = {
        "w1": conv_w((places, in_places, 1, 1)),        # OIHW, PyTorch layout
        "w2": conv_w((places, places, 3, 3)),
        "w3": conv_w((p4, places, 1, 1)),
    }
    params["s1"], params["b1"] = bn_params(places)
    params["s2"], params["b2"] = bn_params(places)
    params["s3"], params["b3"] = bn_params(p4)
    if downsampling:
        params["wd"] = conv_w((p4, in_places, 1, 1))
        params["sd"], params["bd"] = bn_params(p4)
    return params


def _ref_conv(x_nhwc, w_oihw, stride, pad):
    return jax.lax.conv_general_dilated(
        x_nhwc, jnp.transpose(w_oihw, (2, 3, 1, 0)),
        window_strides=(stride, stride), padding=[(pad, pad), (pad, pad)],
        dimension_numbers=("NHWC", "HWIO", "NHWC"))


def base_block_reference(x_nchw, params, *, stride, downsampling):
    x = jnp.transpose(x_nchw, (0, 2, 3, 1))
    y = _ref_conv(x, params["w1"], 1, 0) * params["s1"] + params["b1"]
    y = jnp.maximum(y, 0.0)
    y = _ref_conv(y, params["w2"], stride, 1) * params["s2"] + params["b2"]
    y = jnp.maximum(y, 0.0)
    y = _ref_conv(y, params["w3"], 1, 0) * params["s3"] + params["b3"]
    if downsampling:
        res = _ref_conv(x, params["wd"], stride, 0) * params["sd"] + params["bd"]
    else:
        res = x
    out = jnp.maximum(y + res, 0.0)
    return jnp.transpose(out, (0, 3, 1, 2))


def _run_case(key, n, in_places, places, stride, downsampling, expansion=4):
    kx, kp = jax.random.split(key)
    x = jax.random.normal(kx, (n, in_places, 16, 16), jnp.float32)   # NCHW
    params = init_params(kp, in_places, places, expansion, downsampling)

    fwd = jax.jit(functools.partial(base_block_forward, stride=stride,
                                    downsampling=downsampling, expansion=expansion))
    out = jax.block_until_ready(fwd(x, params))
    ref = jax.block_until_ready(
        base_block_reference(x, params, stride=stride, downsampling=downsampling))

    ho = (16 + 2 - 3) // stride + 1
    assert out.shape == (n, places * expansion, ho, ho), out.shape
    max_err = float(jnp.max(jnp.abs(out - ref)))
    assert jnp.allclose(out, ref, rtol=5e-2, atol=5e-2), max_err
    return max_err


# ---------------------------------------------------------------------------
if __name__ == "__main__":
    key = jax.random.PRNGKey(0)
    k1, k2 = jax.random.split(key)

    # case 1: BaseBlock(in_places=16, places=8, stride=2, downsampling=True)
    _run_case(k1, n=8, in_places=16, places=8, stride=2, downsampling=True)

    # case 2: identity shortcut, BaseBlock(in_places=32, places=8, stride=1)
    _run_case(k2, n=8, in_places=32, places=8, stride=1, downsampling=False)

    print("KERNEL_OK")
</pallas_src>

<mosaic_0001>
module attributes {stable_mosaic.version = 11 : i64} {
  func.func @_bottleneck_kernel(%arg0: i32, %arg1: memref<1x16x16x16xf32, #tpu.memory_space<vmem>>, %arg2: memref<16x8xbf16, #tpu.memory_space<vmem>>, %arg3: memref<1x8xf32, #tpu.memory_space<vmem>>, %arg4: memref<72x8xbf16, #tpu.memory_space<vmem>>, %arg5: memref<1x8xf32, #tpu.memory_space<vmem>>, %arg6: memref<8x32xbf16, #tpu.memory_space<vmem>>, %arg7: memref<1x32xf32, #tpu.memory_space<vmem>>, %arg8: memref<16x32xbf16, #tpu.memory_space<vmem>>, %arg9: memref<1x32xf32, #tpu.memory_space<vmem>>, %arg10: memref<1x8x256xf32, #tpu.memory_space<vmem>>, %arg11: memref<18x18x8xf32, #tpu.memory_space<vmem>>, %arg12: memref<64x72xf32, #tpu.memory_space<vmem>>, %arg13: memref<64x32xf32, #tpu.memory_space<vmem>>) attributes {dimension_semantics = [#tpu.dimension_semantics<parallel>], iteration_bounds = array<i64: 8>, scalar_prefetch = 0 : i64, scratch_operands = 3 : i64, tpu.core_type = #tpu.core_type<tc>, window_params = [{transform_indices = @transform_0, window_bounds = array<i64: 1, 16, 16, 16>}, {pipeline_mode = #tpu.pipeline_mode<synchronous>, transform_indices = @transform_1, window_bounds = array<i64: 16, 8>}, {pipeline_mode = #tpu.pipeline_mode<synchronous>, transform_indices = @transform_2, window_bounds = array<i64: 1, 8>}, {pipeline_mode = #tpu.pipeline_mode<synchronous>, transform_indices = @transform_3, window_bounds = array<i64: 72, 8>}, {pipeline_mode = #tpu.pipeline_mode<synchronous>, transform_indices = @transform_4, window_bounds = array<i64: 1, 8>}, {pipeline_mode = #tpu.pipeline_mode<synchronous>, transform_indices = @transform_5, window_bounds = array<i64: 8, 32>}, {pipeline_mode = #tpu.pipeline_mode<synchronous>, transform_indices = @transform_6, window_bounds = array<i64: 1, 32>}, {pipeline_mode = #tpu.pipeline_mode<synchronous>, transform_indices = @transform_7, window_bounds = array<i64: 16, 32>}, {pipeline_mode = #tpu.pipeline_mode<synchronous>, transform_indices = @transform_8, window_bounds = array<i64: 1, 32>}, {transform_indices = @transform_9, window_bounds = array<i64: 1, 8, 256>}]} {
    %c0 = arith.constant 0 : index
    %c0_0 = arith.constant 0 : index
    %c0_1 = arith.constant 0 : index
    %c0_2 = arith.constant 0 : index
    %0 = vector.load %arg1[%c0, %c0_0, %c0_1, %c0_2] : memref<1x16x16x16xf32, #tpu.memory_space<vmem>>, vector<1x16x16x16xf32>
    %1 = vector.shape_cast %0 : vector<1x16x16x16xf32> to vector<16x16x16xf32>
    %2 = vector.shape_cast %1 : vector<16x16x16xf32> to vector<256x16xf32>
    %3 = arith.truncf %2 : vector<256x16xf32> to vector<256x16xbf16>
    %c0_3 = arith.constant 0 : index
    %c0_4 = arith.constant 0 : index
    %4 = vector.load %arg2[%c0_3, %c0_4] : memref<16x8xbf16, #tpu.memory_space<vmem>>, vector<16x8xbf16>
    %cst = arith.constant dense<0.000000e+00> : vector<256x8xf32>
    %5 = tpu.matmul %3, %4, %cst {dimension_numbers = #tpu.dot_dimension_numbers<[1], [0], [0], [1], [0, 0, 1, 1], [], []>} : vector<256x16xbf16>, vector<16x8xbf16>, vector<256x8xf32> -> vector<256x8xf32>
    %c0_5 = arith.constant 0 : index
    %c0_6 = arith.constant 0 : index
    %6 = vector.load %arg3[%c0_5, %c0_6] : memref<1x8xf32, #tpu.memory_space<vmem>>, vector<1x8xf32>
    %7 = vector.broadcast %6 : vector<1x8xf32> to vector<256x8xf32>
    %8 = arith.addf %5, %7 : vector<256x8xf32>
    %cst_7 = arith.constant 0.000000e+00 : f32
    %9 = vector.broadcast %cst_7 : f32 to vector<256x8xf32>
    %10 = arith.maximumf %8, %9 : vector<256x8xf32>
    %cst_8 = arith.constant 0.000000e+00 : f32
    %11 = vector.broadcast %cst_8 : f32 to vector<1x18x8xf32>
    %c0_9 = arith.constant 0 : index
    %c0_10 = arith.constant 0 : index
    %c0_11 = arith.constant 0 : index
    %12 = vector.load %arg11[%c0_9, %c0_10, %c0_11] : memref<18x18x8xf32, #tpu.memory_space<vmem>>, vector<1x18x8xf32>
    tpu.vector_store %arg11[%c0_9, %c0_10, %c0_11], %11 {strides = array<i32>} : memref<18x18x8xf32, #tpu.memory_space<vmem>>, vector<1x18x8xf32>,
    %cst_12 = arith.constant 0.000000e+00 : f32
    %13 = vector.broadcast %cst_12 : f32 to vector<1x18x8xf32>
    %c17 = arith.constant 17 : index
    %c0_13 = arith.constant 0 : index
    %c0_14 = arith.constant 0 : index
    %14 = vector.load %arg11[%c17, %c0_13, %c0_14] : memref<18x18x8xf32, #tpu.memory_space<vmem>>, vector<1x18x8xf32>
    tpu.vector_store %arg11[%c17, %c0_13, %c0_14], %13 {strides = array<i32>} : memref<18x18x8xf32, #tpu.memory_space<vmem>>, vector<1x18x8xf32>,
    %cst_15 = arith.constant 0.000000e+00 : f32
    %15 = vector.broadcast %cst_15 : f32 to vector<18x1x8xf32>
    %c0_16 = arith.constant 0 : index
    %c0_17 = arith.constant 0 : index
    %c0_18 = arith.constant 0 : index
    %16 = vector.load %arg11[%c0_16, %c0_17, %c0_18] : memref<18x18x8xf32, #tpu.memory_space<vmem>>, vector<18x1x8xf32>
    tpu.vector_store %arg11[%c0_16, %c0_17, %c0_18], %15 {strides = array<i32>} : memref<18x18x8xf32, #tpu.memory_space<vmem>>, vector<18x1x8xf32>,
    %cst_19 = arith.constant 0.000000e+00 : f32
    %17 = vector.broadcast %cst_19 : f32 to vector<18x1x8xf32>
    %c0_20 = arith.constant 0 : index
    %c17_21 = arith.constant 17 : index
    %c0_22 = arith.constant 0 : index
    %18 = vector.load %arg11[%c0_20, %c17_21, %c0_22] : memref<18x18x8xf32, #tpu.memory_space<vmem>>, vector<18x1x8xf32>
    tpu.vector_store %arg11[%c0_20, %c17_21, %c0_22], %17 {strides = array<i32>} : memref<18x18x8xf32, #tpu.memory_space<vmem>>, vector<18x1x8xf32>,
    %19 = vector.shape_cast %10 : vector<256x8xf32> to vector<16x16x8xf32>
    %c1 = arith.constant 1 : index
    %c1_23 = arith.constant 1 : index
    %c0_24 = arith.constant 0 : index
    %20 = vector.load %arg11[%c1, %c1_23, %c0_24] : memref<18x18x8xf32, #tpu.memory_space<vmem>>, vector<16x16x8xf32>
    tpu.vector_store %arg11[%c1, %c1_23, %c0_24], %19 {strides = array<i32>} : memref<18x18x8xf32, #tpu.memory_space<vmem>>, vector<16x16x8xf32>,
    %c0_25 = arith.constant 0 : index
    %c0_26 = arith.constant 0 : index
    %c0_27 = arith.constant 0 : index
    %21 = tpu.strided_load %arg11[%c0_25, %c0_26, %c0_27] {strides = array<i32: 2, 2, 1>} : memref<18x18x8xf32, #tpu.memory_space<vmem>>, vector<8x8x8xf32>
    %22 = vector.shape_cast %21 : vector<8x8x8xf32> to vector<64x8xf32>
    %c0_28 = arith.constant 0 : index
    %c0_29 = arith.constant 0 : index
    %23 = vector.load %arg12[%c0_28, %c0_29] : memref<64x72xf32, #tpu.memory_space<vmem>>, vector<64x8xf32>
    tpu.vector_store %arg12[%c0_28, %c0_29], %22 {strides = array<i32>} : memref<64x72xf32, #tpu.memory_space<vmem>>, vector<64x8xf32>,
    %c0_30 = arith.constant 0 : index
    %c1_31 = arith.constant 1 : index
    %c0_32 = arith.constant 0 : index
    %24 = tpu.strided_load %arg11[%c0_30, %c1_31, %c0_32] {strides = array<i32: 2, 2, 1>} : memref<18x18x8xf32, #tpu.memory_space<vmem>>, vector<8x8x8xf32>
    %25 = vector.shape_cast %24 : vector<8x8x8xf32> to vector<64x8xf32>
    %c0_33 = arith.constant 0 : index
    %c8 = arith.constant 8 : index
    %26 = vector.load %arg12[%c0_33, %c8] : memref<64x72xf32, #tpu.memory_space<vmem>>, vector<64x8xf32>
    tpu.vector_store %arg12[%c0_33, %c8], %25 {strides = array<i32>} : memref<64x72xf32, #tpu.memory_space<vmem>>, vector<64x8xf32>,
    %c0_34 = arith.constant 0 : index
    %c2 = arith.constant 2 : index
    %c0_35 = arith.constant 0 : index
    %27 = tpu.strided_load %arg11[%c0_34, %c2, %c0_35] {strides = array<i32: 2, 2, 1>} : memref<18x18x8xf32, #tpu.memory_space<vmem>>, vector<8x8x8xf32>
    %28 = vector.shape_cast %27 : vector<8x8x8xf32> to vector<64x8xf32>
    %c0_36 = arith.constant 0 : index
    %c16 = arith.constant 16 : index
    %29 = vector.load %arg12[%c0_36, %c16] : memref<64x72xf32, #tpu.memory_space<vmem>>, vector<64x8xf32>
    tpu.vector_store %arg12[%c0_36, %c16], %28 {strides = array<i32>} : memref<64x72xf32, #tpu.memory_space<vmem>>, vector<64x8xf32>,
    %c1_37 = arith.constant 1 : index
    %c0_38 = arith.constant 0 : index
    %c0_39 = arith.constant 0 : index
    %30 = tpu.strided_load %arg11[%c1_37, %c0_38, %c0_39] {strides = array<i32: 2, 2, 1>} : memref<18x18x8xf32, #tpu.memory_space<vmem>>, vector<8x8x8xf32>
    %31 = vector.shape_cast %30 : vector<8x8x8xf32> to vector<64x8xf32>
    %c0_40 = arith.constant 0 : index
    %c24 = arith.constant 24 : index
    %32 = vector.load %arg12[%c0_40, %c24] : memref<64x72xf32, #tpu.memory_space<vmem>>, vector<64x8xf32>
    tpu.vector_store %arg12[%c0_40, %c24], %31 {strides = array<i32>} : memref<64x72xf32, #tpu.memory_space<vmem>>, vector<64x8xf32>,
    %c1_41 = arith.constant 1 : index
    %c1_42 = arith.constant 1 : index
    %c0_43 = arith.constant 0 : index
    %33 = tpu.strided_load %arg11[%c1_41, %c1_42, %c0_43] {strides = array<i32: 2, 2, 1>} : memref<18x18x8xf32, #tpu.memory_space<vmem>>, vector<8x8x8xf32>
    %34 = vector.shape_cast %33 : vector<8x8x8xf32> to vector<64x8xf32>
    %c0_44 = arith.constant 0 : index
    %c32 = arith.constant 32 : index
    %35 = vector.load %arg12[%c0_44, %c32] : memref<64x72xf32, #tpu.memory_space<vmem>>, vector<64x8xf32>
    tpu.vector_store %arg12[%c0_44, %c32], %34 {strides = array<i32>} : memref<64x72xf32, #tpu.memory_space<vmem>>, vector<64x8xf32>,
    %c1_45 = arith.constant 1 : index
    %c2_46 = arith.constant 2 : index
    %c0_47 = arith.constant 0 : index
    %36 = tpu.strided_load %arg11[%c1_45, %c2_46, %c0_47] {strides = array<i32: 2, 2, 1>} : memref<18x18x8xf32, #tpu.memory_space<vmem>>, vector<8x8x8xf32>
    %37 = vector.shape_cast %36 : vector<8x8x8xf32> to vector<64x8xf32>
    %c0_48 = arith.constant 0 : index
    %c40 = arith.constant 40 : index
    %38 = vector.load %arg12[%c0_48, %c40] : memref<64x72xf32, #tpu.memory_space<vmem>>, vector<64x8xf32>
    tpu.vector_store %arg12[%c0_48, %c40], %37 {strides = array<i32>} : memref<64x72xf32, #tpu.memory_space<vmem>>, vector<64x8xf32>,
    %c2_49 = arith.constant 2 : index
    %c0_50 = arith.constant 0 : index
    %c0_51 = arith.constant 0 : index
    %39 = tpu.strided_load %arg11[%c2_49, %c0_50, %c0_51] {strides = array<i32: 2, 2, 1>} : memref<18x18x8xf32, #tpu.memory_space<vmem>>, vector<8x8x8xf32>
    %40 = vector.shape_cast %39 : vector<8x8x8xf32> to vector<64x8xf32>
    %c0_52 = arith.constant 0 : index
    %c48 = arith.constant 48 : index
    %41 = vector.load %arg12[%c0_52, %c48] : memref<64x72xf32, #tpu.memory_space<vmem>>, vector<64x8xf32>
    tpu.vector_store %arg12[%c0_52, %c48], %40 {strides = array<i32>} : memref<64x72xf32, #tpu.memory_space<vmem>>, vector<64x8xf32>,
    %c2_53 = arith.constant 2 : index
    %c1_54 = arith.constant 1 : index
    %c0_55 = arith.constant 0 : index
    %42 = tpu.strided_load %arg11[%c2_53, %c1_54, %c0_55] {strides = array<i32: 2, 2, 1>} : memref<18x18x8xf32, #tpu.memory_space<vmem>>, vector<8x8x8xf32>
    %43 = vector.shape_cast %42 : vector<8x8x8xf32> to vector<64x8xf32>
    %c0_56 = arith.constant 0 : index
    %c56 = arith.constant 56 : index
    %44 = vector.load %arg12[%c0_56, %c56] : memref<64x72xf32, #tpu.memory_space<vmem>>, vector<64x8xf32>
    tpu.vector_store %arg12[%c0_56, %c56], %43 {strides = array<i32>} : memref<64x72xf32, #tpu.memory_space<vmem>>, vector<64x8xf32>,
    %c2_57 = arith.constant 2 : index
    %c2_58 = arith.constant 2 : index
    %c0_59 = arith.constant 0 : index
    %45 = tpu.strided_load %arg11[%c2_57, %c2_58, %c0_59] {strides = array<i32: 2, 2, 1>} : memref<18x18x8xf32, #tpu.memory_space<vmem>>, vector<8x8x8xf32>
    %46 = vector.shape_cast %45 : vector<8x8x8xf32> to vector<64x8xf32>
    %c0_60 = arith.constant 0 : index
    %c64 = arith.constant 64 : index
    %47 = vector.load %arg12[%c0_60, %c64] : memref<64x72xf32, #tpu.memory_space<vmem>>, vector<64x8xf32>
    tpu.vector_store %arg12[%c0_60, %c64], %46 {strides = array<i32>} : memref<64x72xf32, #tpu.memory_space<vmem>>, vector<64x8xf32>,
    %c0_61 = arith.constant 0 : index
    %c0_62 = arith.constant 0 : index
    %48 = vector.load %arg12[%c0_61, %c0_62] : memref<64x72xf32, #tpu.memory_space<vmem>>, vector<64x72xf32>
    %49 = arith.truncf %48 : vector<64x72xf32> to vector<64x72xbf16>
    %c0_63 = arith.constant 0 : index
    %c0_64 = arith.constant 0 : index
    %50 = vector.load %arg4[%c0_63, %c0_64] : memref<72x8xbf16, #tpu.memory_space<vmem>>, vector<72x8xbf16>
    %cst_65 = arith.constant dense<0.000000e+00> : vector<64x8xf32>
    %51 = tpu.matmul %49, %50, %cst_65 {dimension_numbers = #tpu.dot_dimension_numbers<[1], [0], [0], [1], [0, 0, 1, 1], [], []>} : vector<64x72xbf16>, vector<72x8xbf16>, vector<64x8xf32> -> vector<64x8xf32>
    %c0_66 = arith.constant 0 : index
    %c0_67 = arith.constant 0 : index
    %52 = vector.load %arg5[%c0_66, %c0_67] : memref<1x8xf32, #tpu.memory_space<vmem>>, vector<1x8xf32>
    %53 = vector.broadcast %52 : vector<1x8xf32> to vector<64x8xf32>
    %54 = arith.addf %51, %53 : vector<64x8xf32>
    %cst_68 = arith.constant 0.000000e+00 : f32
    %55 = vector.broadcast %cst_68 : f32 to vector<64x8xf32>
    %56 = arith.maximumf %54, %55 : vector<64x8xf32>
    %c0_69 = arith.constant 0 : index
    %c0_70 = arith.constant 0 : index
    %c0_71 = arith.constant 0 : index
    %c0_72 = arith.constant 0 : index
    %57 = tpu.strided_load %arg1[%c0_69, %c0_70, %c0_71, %c0_72] {strides = array<i32: 1, 2, 2, 1>} : memref<1x16x16x16xf32, #tpu.memory_space<vmem>>, vector<1x8x8x16xf32>
    %58 = vector.shape_cast %57 : vector<1x8x8x16xf32> to vector<8x8x16xf32>
    %59 = vector.shape_cast %58 : vector<8x8x16xf32> to vector<64x16xf32>
    %60 = arith.truncf %59 : vector<64x16xf32> to vector<64x16xbf16>
    %c0_73 = arith.constant 0 : index
    %c0_74 = arith.constant 0 : index
    %61 = vector.load %arg8[%c0_73, %c0_74] : memref<16x32xbf16, #tpu.memory_space<vmem>>, vector<16x32xbf16>
    %cst_75 = arith.constant dense<0.000000e+00> : vector<64x32xf32>
    %62 = tpu.matmul %60, %61, %cst_75 {dimension_numbers = #tpu.dot_dimension_numbers<[1], [0], [0], [1], [0, 0, 1, 1], [], []>} : vector<64x16xbf16>, vector<16x32xbf16>, vector<64x32xf32> -> vector<64x32xf32>
    %c0_76 = arith.constant 0 : index
    %c0_77 = arith.constant 0 : index
    %63 = vector.load %arg9[%c0_76, %c0_77] : memref<1x32xf32, #tpu.memory_space<vmem>>, vector<1x32xf32>
    %64 = vector.broadcast %63 : vector<1x32xf32> to vector<64x32xf32>
    %65 = arith.addf %62, %64 : vector<64x32xf32>
    %66 = arith.truncf %56 : vector<64x8xf32> to vector<64x8xbf16>
    %c0_78 = arith.constant 0 : index
    %c0_79 = arith.constant 0 : index
    %67 = vector.load %arg6[%c0_78, %c0_79] : memref<8x32xbf16, #tpu.memory_space<vmem>>, vector<8x32xbf16>
    %cst_80 = arith.constant dense<0.000000e+00> : vector<64x32xf32>
    %68 = tpu.matmul %66, %67, %cst_80 {dimension_numbers = #tpu.dot_dimension_numbers<[1], [0], [0], [1], [0, 0, 1, 1], [], []>} : vector<64x8xbf16>, vector<8x32xbf16>, vector<64x32xf32> -> vector<64x32xf32>
    %c0_81 = arith.constant 0 : index
    %c0_82 = arith.constant 0 : index
    %69 = vector.load %arg7[%c0_81, %c0_82] : memref<1x32xf32, #tpu.memory_space<vmem>>, vector<1x32xf32>
    %70 = vector.broadcast %69 : vector<1x32xf32> to vector<64x32xf32>
    %71 = arith.addf %68, %70 : vector<64x32xf32>
    %72 = arith.addf %71, %65 : vector<64x32xf32>
    %cst_83 = arith.constant 0.000000e+00 : f32
    %73 = vector.broadcast %cst_83 : f32 to vector<64x32xf32>
    %74 = arith.maximumf %72, %73 : vector<64x32xf32>
    %c0_84 = arith.constant 0 : index
    %c0_85 = arith.constant 0 : index
    %75 = vector.load %arg13[%c0_84, %c0_85] : memref<64x32xf32, #tpu.memory_space<vmem>>, vector<64x32xf32>
    tpu.vector_store %arg13[%c0_84, %c0_85], %74 {strides = array<i32>} : memref<64x32xf32, #tpu.memory_space<vmem>>, vector<64x32xf32>,
    %c0_86 = arith.constant 0 : index
    %c0_87 = arith.constant 0 : index
    %76 = tpu.strided_load %arg13[%c0_86, %c0_87] {strides = array<i32: 8, 1>} : memref<64x32xf32, #tpu.memory_space<vmem>>, vector<8x32xf32>
    %c0_88 = arith.constant 0 : index
    %c0_89 = arith.constant 0 : index
    %c0_90 = arith.constant 0 : index
    %77 = vector.load %arg10[%c0_88, %c0_89, %c0_90] : memref<1x8x256xf32, #tpu.memory_space<vmem>>, vector<1x8x32xf32>
    %78 = vector.shape_cast %77 : vector<1x8x32xf32> to vector<8x32xf32>
    %79 = vector.shape_cast %76 : vector<8x32xf32> to vector<1x8x32xf32>
    tpu.vector_store %arg10[%c0_88, %c0_89, %c0_90], %79 {strides = array<i32>} : memref<1x8x256xf32, #tpu.memory_space<vmem>>, vector<1x8x32xf32>,
    %c1_91 = arith.constant 1 : index
    %c0_92 = arith.constant 0 : index
    %80 = tpu.strided_load %arg13[%c1_91, %c0_92] {strides = array<i32: 8, 1>} : memref<64x32xf32, #tpu.memory_space<vmem>>, vector<8x32xf32>
    %c0_93 = arith.constant 0 : index
    %c0_94 = arith.constant 0 : index
    %c32_95 = arith.constant 32 : index
    %81 = vector.load %arg10[%c0_93, %c0_94, %c32_95] : memref<1x8x256xf32, #tpu.memory_space<vmem>>, vector<1x8x32xf32>
    %82 = vector.shape_cast %81 : vector<1x8x32xf32> to vector<8x32xf32>
    %83 = vector.shape_cast %80 : vector<8x32xf32> to vector<1x8x32xf32>
    tpu.vector_store %arg10[%c0_93, %c0_94, %c32_95], %83 {strides = array<i32>} : memref<1x8x256xf32, #tpu.memory_space<vmem>>, vector<1x8x32xf32>,
    %c2_96 = arith.constant 2 : index
    %c0_97 = arith.constant 0 : index
    %84 = tpu.strided_load %arg13[%c2_96, %c0_97] {strides = array<i32: 8, 1>} : memref<64x32xf32, #tpu.memory_space<vmem>>, vector<8x32xf32>
    %c0_98 = arith.constant 0 : index
    %c0_99 = arith.constant 0 : index
    %c64_100 = arith.constant 64 : index
    %85 = vector.load %arg10[%c0_98, %c0_99, %c64_100] : memref<1x8x256xf32, #tpu.memory_space<vmem>>, vector<1x8x32xf32>
    %86 = vector.shape_cast %85 : vector<1x8x32xf32> to vector<8x32xf32>
    %87 = vector.shape_cast %84 : vector<8x32xf32> to vector<1x8x32xf32>
    tpu.vector_store %arg10[%c0_98, %c0_99, %c64_100], %87 {strides = array<i32>} : memref<1x8x256xf32, #tpu.memory_space<vmem>>, vector<1x8x32xf32>,
    %c3 = arith.constant 3 : index
    %c0_101 = arith.constant 0 : index
    %88 = tpu.strided_load %arg13[%c3, %c0_101] {strides = array<i32: 8, 1>} : memref<64x32xf32, #tpu.memory_space<vmem>>, vector<8x32xf32>
    %c0_102 = arith.constant 0 : index
    %c0_103 = arith.constant 0 : index
    %c96 = arith.constant 96 : index
    %89 = vector.load %arg10[%c0_102, %c0_103, %c96] : memref<1x8x256xf32, #tpu.memory_space<vmem>>, vector<1x8x32xf32>
    %90 = vector.shape_cast %89 : vector<1x8x32xf32> to vector<8x32xf32>
    %91 = vector.shape_cast %88 : vector<8x32xf32> to vector<1x8x32xf32>
    tpu.vector_store %arg10[%c0_102, %c0_103, %c96], %91 {strides = array<i32>} : memref<1x8x256xf32, #tpu.memory_space<vmem>>, vector<1x8x32xf32>,
    %c4 = arith.constant 4 : index
    %c0_104 = arith.constant 0 : index
    %92 = tpu.strided_load %arg13[%c4, %c0_104] {strides = array<i32: 8, 1>} : memref<64x32xf32, #tpu.memory_space<vmem>>, vector<8x32xf32>
    %c0_105 = arith.constant 0 : index
    %c0_106 = arith.constant 0 : index
    %c128 = arith.constant 128 : index
    %93 = vector.load %arg10[%c0_105, %c0_106, %c128] : memref<1x8x256xf32, #tpu.memory_space<vmem>>, vector<1x8x32xf32>
    %94 = vector.shape_cast %93 : vector<1x8x32xf32> to vector<8x32xf32>
    %95 = vector.shape_cast %92 : vector<8x32xf32> to vector<1x8x32xf32>
    tpu.vector_store %arg10[%c0_105, %c0_106, %c128], %95 {strides = array<i32>} : memref<1x8x256xf32, #tpu.memory_space<vmem>>, vector<1x8x32xf32>,
    %c5 = arith.constant 5 : index
    %c0_107 = arith.constant 0 : index
    %96 = tpu.strided_load %arg13[%c5, %c0_107] {strides = array<i32: 8, 1>} : memref<64x32xf32, #tpu.memory_space<vmem>>, vector<8x32xf32>
    %c0_108 = arith.constant 0 : index
    %c0_109 = arith.constant 0 : index
    %c160 = arith.constant 160 : index
    %97 = vector.load %arg10[%c0_108, %c0_109, %c160] : memref<1x8x256xf32, #tpu.memory_space<vmem>>, vector<1x8x32xf32>
    %98 = vector.shape_cast %97 : vector<1x8x32xf32> to vector<8x32xf32>
    %99 = vector.shape_cast %96 : vector<8x32xf32> to vector<1x8x32xf32>
    tpu.vector_store %arg10[%c0_108, %c0_109, %c160], %99 {strides = array<i32>} : memref<1x8x256xf32, #tpu.memory_space<vmem>>, vector<1x8x32xf32>,
    %c6 = arith.constant 6 : index
    %c0_110 = arith.constant 0 : index
    %100 = tpu.strided_load %arg13[%c6, %c0_110] {strides = array<i32: 8, 1>} : memref<64x32xf32, #tpu.memory_space<vmem>>, vector<8x32xf32>
    %c0_111 = arith.constant 0 : index
    %c0_112 = arith.constant 0 : index
    %c192 = arith.constant 192 : index
    %101 = vector.load %arg10[%c0_111, %c0_112, %c192] : memref<1x8x256xf32, #tpu.memory_space<vmem>>, vector<1x8x32xf32>
    %102 = vector.shape_cast %101 : vector<1x8x32xf32> to vector<8x32xf32>
    %103 = vector.shape_cast %100 : vector<8x32xf32> to vector<1x8x32xf32>
    tpu.vector_store %arg10[%c0_111, %c0_112, %c192], %103 {strides = array<i32>} : memref<1x8x256xf32, #tpu.memory_space<vmem>>, vector<1x8x32xf32>,
    %c7 = arith.constant 7 : index
    %c0_113 = arith.constant 0 : index
    %104 = tpu.strided_load %arg13[%c7, %c0_113] {strides = array<i32: 8, 1>} : memref<64x32xf32, #tpu.memory_space<vmem>>, vector<8x32xf32>
    %c0_114 = arith.constant 0 : index
    %c0_115 = arith.constant 0 : index
    %c224 = arith.constant 224 : index
    %105 = vector.load %arg10[%c0_114, %c0_115, %c224] : memref<1x8x256xf32, #tpu.memory_space<vmem>>, vector<1x8x32xf32>
    %106 = vector.shape_cast %105 : vector<1x8x32xf32> to vector<8x32xf32>
    %107 = vector.shape_cast %104 : vector<8x32xf32> to vector<1x8x32xf32>
    tpu.vector_store %arg10[%c0_114, %c0_115, %c224], %107 {strides = array<i32>} : memref<1x8x256xf32, #tpu.memory_space<vmem>>, vector<1x8x32xf32>,
    return
  }
  func.func @transform_0(%arg0: i32) -> (i32, i32, i32, i32) {
    %c0_i32 = arith.constant 0 : i32
    %c0_i32_0 = arith.constant 0 : i32
    %c0_i32_1 = arith.constant 0 : i32
    %c0_i32_2 = arith.constant 0 : i32
    return %arg0, %c0_i32, %c0_i32_0, %c0_i32_1 : i32, i32, i32, i32
  }
  func.func @transform_1(%arg0: i32) -> (i32, i32) {
    %c0_i32 = arith.constant 0 : i32
    %c0_i32_0 = arith.constant 0 : i32
    %c0_i32_1 = arith.constant 0 : i32
    return %c0_i32, %c0_i32_0 : i32, i32
  }
  func.func @transform_2(%arg0: i32) -> (i32, i32) {
    %c0_i32 = arith.constant 0 : i32
    %c0_i32_0 = arith.constant 0 : i32
    %c0_i32_1 = arith.constant 0 : i32
    return %c0_i32, %c0_i32_0 : i32, i32
  }
  func.func @transform_3(%arg0: i32) -> (i32, i32) {
    %c0_i32 = arith.constant 0 : i32
    %c0_i32_0 = arith.constant 0 : i32
    %c0_i32_1 = arith.constant 0 : i32
    return %c0_i32, %c0_i32_0 : i32, i32
  }
  func.func @transform_4(%arg0: i32) -> (i32, i32) {
    %c0_i32 = arith.constant 0 : i32
    %c0_i32_0 = arith.constant 0 : i32
    %c0_i32_1 = arith.constant 0 : i32
    return %c0_i32, %c0_i32_0 : i32, i32
  }
  func.func @transform_5(%arg0: i32) -> (i32, i32) {
    %c0_i32 = arith.constant 0 : i32
    %c0_i32_0 = arith.constant 0 : i32
    %c0_i32_1 = arith.constant 0 : i32
    return %c0_i32, %c0_i32_0 : i32, i32
  }
  func.func @transform_6(%arg0: i32) -> (i32, i32) {
    %c0_i32 = arith.constant 0 : i32
    %c0_i32_0 = arith.constant 0 : i32
    %c0_i32_1 = arith.constant 0 : i32
    return %c0_i32, %c0_i32_0 : i32, i32
  }
  func.func @transform_7(%arg0: i32) -> (i32, i32) {
    %c0_i32 = arith.constant 0 : i32
    %c0_i32_0 = arith.constant 0 : i32
    %c0_i32_1 = arith.constant 0 : i32
    return %c0_i32, %c0_i32_0 : i32, i32
  }
  func.func @transform_8(%arg0: i32) -> (i32, i32) {
    %c0_i32 = arith.constant 0 : i32
    %c0_i32_0 = arith.constant 0 : i32
    %c0_i32_1 = arith.constant 0 : i32
    return %c0_i32, %c0_i32_0 : i32, i32
  }
  func.func @transform_9(%arg0: i32) -> (i32, i32, i32) {
    %c0_i32 = arith.constant 0 : i32
    %c0_i32_0 = arith.constant 0 : i32
    %c0_i32_1 = arith.constant 0 : i32
    return %arg0, %c0_i32, %c0_i32_0 : i32, i32, i32
  }
}

</mosaic_0001>

<llo_original>
// kernel: base_block_forward.1
$region0: #{base_block_forward.1}
  #allocation0 [shape = 'u32[]', space=smem, size = 0x4, offset = 0x4, fixed_abs, tag = 'smem constant byte address 0x4 - core index']
  #allocation1 [shape = 'u32[72,128]{1,0:T(1,128)}', space=vmem, size = 0x9000, scoped, tag = 'internal scratch']
  #allocation2 [shape = 'f32[18,18,8]{2,1,0:T(8,128)}', space=vmem, size = 0x36000, scoped, tag = 'scratch operand']
  #allocation3 [shape = 'f32[64,72]{1,0:T(8,128)}', space=vmem, size = 0x8000, scoped, tag = 'scratch operand']
  #allocation4 [shape = 'f32[64,32]{1,0:T(8,128)}', space=vmem, size = 0x8000, scoped, tag = 'scratch operand']
  %s0 = inlined_call_operand.vmem [shape: f32[8,16,16,16], index: 0, kind: input, shape index: {}]
  %s1 = inlined_call_operand.vmem [shape: bf16[16,8], index: 1, kind: input, shape index: {}]
  %s2 = inlined_call_operand.vmem [shape: f32[1,8], index: 2, kind: input, shape index: {}]
  %s3 = inlined_call_operand.vmem [shape: bf16[72,8], index: 3, kind: input, shape index: {}]
  %s4 = inlined_call_operand.vmem [shape: f32[1,8], index: 4, kind: input, shape index: {}]
  %s5 = inlined_call_operand.vmem [shape: bf16[8,32], index: 5, kind: input, shape index: {}]
  %s6 = inlined_call_operand.vmem [shape: f32[1,32], index: 6, kind: input, shape index: {}]
  %s7 = inlined_call_operand.vmem [shape: bf16[16,32], index: 7, kind: input, shape index: {}]
  %s8 = inlined_call_operand.vmem [shape: f32[1,32], index: 8, kind: input, shape index: {}]
  %s9 = inlined_call_operand.vmem [shape: f32[8,8,256], index: 9, kind: output, shape index: {}]
  %s10 = sld [smem:[#allocation0]]
  $region69: #{base_block_forward.1} parent=0
    _
  %s12 = ssub.s32 1, %s10
  %s13 = scalar_select 0, %s12, %s10
  loop: start=0, step=1, limit=10
  $region2: #{base_block_forward.1} parent=0 // loop_pre_header
    _
  $region3: #{base_block_forward.1} parent=0 // loop_header
    %s15 = sphi 0, %s19
    %p16 = scmp.ge.s32.totalorder %s15, 10
    %s25 = sphi 0, %s27
    %s28 = sphi 0, %s25
    %s29 = sphi 0, %s28
    %s45 = sphi 0, %s29
    %s49 = sphi 0, %s49
    %s51 = sphi 0, %s49
    %s52 = sphi 0, %s51
    %s66 = sphi 0, %s52
    %s70 = sphi 0, %s70
    %s72 = sphi 0, %s70
    %s73 = sphi 0, %s72
    %s87 = sphi 0, %s73
    %s91 = sphi 0, %s91
    %s93 = sphi 0, %s91
    %s94 = sphi 0, %s93
    %s108 = sphi 0, %s94
    %s112 = sphi 0, %s112
    %s114 = sphi 0, %s112
    %s115 = sphi 0, %s114
    %s129 = sphi 0, %s115
    %s133 = sphi 0, %s133
    %s135 = sphi 0, %s133
    %s136 = sphi 0, %s135
    %s150 = sphi 0, %s136
    %s154 = sphi 0, %s154
    %s156 = sphi 0, %s154
    %s157 = sphi 0, %s156
    %s171 = sphi 0, %s157
    %s175 = sphi 0, %s175
    %s177 = sphi 0, %s175
    %s178 = sphi 0, %s177
    %s192 = sphi 0, %s178
    %s196 = sphi 0, %s196
    %s198 = sphi 0, %s196
    %s199 = sphi 0, %s198
    %s213 = sphi 0, %s199
    %s219 = sphi 0, %s221
    %s222 = sphi 0, %s219
    %s223 = sphi 0, %s222
    %s239 = sphi 0, %s223
  $region4: #{base_block_forward.1} parent=0 // loop_header_branch
    %18 = sbr.rel (%p16) target = $region8
  $region5: #{base_block_forward.1} parent=0 // loop_body
    %s20 = ssub.s32 %s15, 1
    %s21 = ssub.s32 %s15, 2
    %s22 = sadd.s32 %s15, 1
    %s23 = ssub.s32 %s15, %s22
    %p24 = scmp.eq.s32.totalorder %s23, 0
    %s26 = sadd.s32 %s25, 1
    %s27 = scalar_select %p24, %s25, %s26
    %p30 = pneg %p24
    %p31 = scmp.eq.s32.totalorder %s15, 7
    %p32 = por %p30, %p31
    %p33 = scmp.ne.s32.totalorder %s25, %s28
    %p34 = scmp.eq.s32.totalorder %s15, 0
    %p35 = por %p33, %p34
    %p36 = scmp.ne.s32.totalorder %s25, %s28
    %p37 = scmp.eq.s32.totalorder %s20, 7
    %p38 = por %p36, %p37
    %p39 = scmp.ne.s32.totalorder %s28, %s29
    %p40 = scmp.eq.s32.totalorder %s20, 0
    %p41 = por %p39, %p40
    %p42 = scmp.ne.s32.totalorder %s28, %s29
    %p43 = scmp.eq.s32.totalorder %s21, 7
    %p44 = por %p42, %p43
    %p46 = scmp.ne.s32.totalorder %s29, %s45
    %p47 = scmp.eq.s32.totalorder %s21, 0
    %p48 = por %p46, %p47
    %s50 = sadd.s32 %s49, 1
    %p53 = scmp.eq.s32.totalorder %s15, 7
    %p54 = scmp.ne.s32.totalorder %s49, %s51
    %p55 = scmp.eq.s32.totalorder %s15, 0
    %p56 = por %p54, %p55
    %p57 = scmp.ne.s32.totalorder %s49, %s51
    %p58 = scmp.eq.s32.totalorder %s20, 7
    %p59 = por %p57, %p58
    %p60 = scmp.ne.s32.totalorder %s51, %s52
    %p61 = scmp.eq.s32.totalorder %s20, 0
    %p62 = por %p60, %p61
    %p63 = scmp.ne.s32.totalorder %s51, %s52
    %p64 = scmp.eq.s32.totalorder %s21, 7
    %p65 = por %p63, %p64
    %p67 = scmp.ne.s32.totalorder %s52, %s66
    %p68 = scmp.eq.s32.totalorder %s21, 0
    %p69 = por %p67, %p68
    %s71 = sadd.s32 %s70, 1
    %p74 = scmp.eq.s32.totalorder %s15, 7
    %p75 = scmp.ne.s32.totalorder %s70, %s72
    %p76 = scmp.eq.s32.totalorder %s15, 0
    %p77 = por %p75, %p76
    %p78 = scmp.ne.s32.totalorder %s70, %s72
    %p79 = scmp.eq.s32.totalorder %s20, 7
    %p80 = por %p78, %p79
    %p81 = scmp.ne.s32.totalorder %s72, %s73
    %p82 = scmp.eq.s32.totalorder %s20, 0
    %p83 = por %p81, %p82
    %p84 = scmp.ne.s32.totalorder %s72, %s73
    %p85 = scmp.eq.s32.totalorder %s21, 7
    %p86 = por %p84, %p85
    %p88 = scmp.ne.s32.totalorder %s73, %s87
    %p89 = scmp.eq.s32.totalorder %s21, 0
    %p90 = por %p88, %p89
    %s92 = sadd.s32 %s91, 1
    %p95 = scmp.eq.s32.totalorder %s15, 7
    %p96 = scmp.ne.s32.totalorder %s91, %s93
    %p97 = scmp.eq.s32.totalorder %s15, 0
    %p98 = por %p96, %p97
    %p99 = scmp.ne.s32.totalorder %s91, %s93
    %p100 = scmp.eq.s32.totalorder %s20, 7
    %p101 = por %p99, %p100
    %p102 = scmp.ne.s32.totalorder %s93, %s94
    %p103 = scmp.eq.s32.totalorder %s20, 0
    %p104 = por %p102, %p103
    %p105 = scmp.ne.s32.totalorder %s93, %s94
    %p106 = scmp.eq.s32.totalorder %s21, 7
    %p107 = por %p105, %p106
    %p109 = scmp.ne.s32.totalorder %s94, %s108
    %p110 = scmp.eq.s32.totalorder %s21, 0
    %p111 = por %p109, %p110
    %s113 = sadd.s32 %s112, 1
    %p116 = scmp.eq.s32.totalorder %s15, 7
    %p117 = scmp.ne.s32.totalorder %s112, %s114
    %p118 = scmp.eq.s32.totalorder %s15, 0
    %p119 = por %p117, %p118
    %p120 = scmp.ne.s32.totalorder %s112, %s114
    %p121 = scmp.eq.s32.totalorder %s20, 7
    %p122 = por %p120, %p121
    %p123 = scmp.ne.s32.totalorder %s114, %s115
    %p124 = scmp.eq.s32.totalorder %s20, 0
    %p125 = por %p123, %p124
    %p126 = scmp.ne.s32.totalorder %s114, %s115
    %p127 = scmp.eq.s32.totalorder %s21, 7
    %p128 = por %p126, %p127
    %p130 = scmp.ne.s32.totalorder %s115, %s129
    %p131 = scmp.eq.s32.totalorder %s21, 0
    %p132 = por %p130, %p131
    %s134 = sadd.s32 %s133, 1
    %p137 = scmp.eq.s32.totalorder %s15, 7
    %p138 = scmp.ne.s32.totalorder %s133, %s135
    %p139 = scmp.eq.s32.totalorder %s15, 0
    %p140 = por %p138, %p139
    %p141 = scmp.ne.s32.totalorder %s133, %s135
    %p142 = scmp.eq.s32.totalorder %s20, 7
    %p143 = por %p141, %p142
    %p144 = scmp.ne.s32.totalorder %s135, %s136
    %p145 = scmp.eq.s32.totalorder %s20, 0
    %p146 = por %p144, %p145
    %p147 = scmp.ne.s32.totalorder %s135, %s136
    %p148 = scmp.eq.s32.totalorder %s21, 7
    %p149 = por %p147, %p148
    %p151 = scmp.ne.s32.totalorder %s136, %s150
    %p152 = scmp.eq.s32.totalorder %s21, 0
    %p153 = por %p151, %p152
    %s155 = sadd.s32 %s154, 1
    %p158 = scmp.eq.s32.totalorder %s15, 7
    %p159 = scmp.ne.s32.totalorder %s154, %s156
    %p160 = scmp.eq.s32.totalorder %s15, 0
    %p161 = por %p159, %p160
    %p162 = scmp.ne.s32.totalorder %s154, %s156
    %p163 = scmp.eq.s32.totalorder %s20, 7
    %p164 = por %p162, %p163
    %p165 = scmp.ne.s32.totalorder %s156, %s157
    %p166 = scmp.eq.s32.totalorder %s20, 0
    %p167 = por %p165, %p166
    %p168 = scmp.ne.s32.totalorder %s156, %s157
    %p169 = scmp.eq.s32.totalorder %s21, 7
    %p170 = por %p168, %p169
    %p172 = scmp.ne.s32.totalorder %s157, %s171
    %p173 = scmp.eq.s32.totalorder %s21, 0
    %p174 = por %p172, %p173
    %s176 = sadd.s32 %s175, 1
    %p179 = scmp.eq.s32.totalorder %s15, 7
    %p180 = scmp.ne.s32.totalorder %s175, %s177
    %p181 = scmp.eq.s32.totalorder %s15, 0
    %p182 = por %p180, %p181
    %p183 = scmp.ne.s32.totalorder %s175, %s177
    %p184 = scmp.eq.s32.totalorder %s20, 7
    %p185 = por %p183, %p184
    %p186 = scmp.ne.s32.totalorder %s177, %s178
    %p187 = scmp.eq.s32.totalorder %s20, 0
    %p188 = por %p186, %p187
    %p189 = scmp.ne.s32.totalorder %s177, %s178
    %p190 = scmp.eq.s32.totalorder %s21, 7
    %p191 = por %p189, %p190
    %p193 = scmp.ne.s32.totalorder %s178, %s192
    %p194 = scmp.eq.s32.totalorder %s21, 0
    %p195 = por %p193, %p194
    %s197 = sadd.s32 %s196, 1
    %p200 = scmp.eq.s32.totalorder %s15, 7
    %p201 = scmp.ne.s32.totalorder %s196, %s198
    %p202 = scmp.eq.s32.totalorder %s15, 0
    %p203 = por %p201, %p202
    %p204 = scmp.ne.s32.totalorder %s196, %s198
    %p205 = scmp.eq.s32.totalorder %s20, 7
    %p206 = por %p204, %p205
    %p207 = scmp.ne.s32.totalorder %s198, %s199
    %p208 = scmp.eq.s32.totalorder %s20, 0
    %p209 = por %p207, %p208
    %p210 = scmp.ne.s32.totalorder %s198, %s199
    %p211 = scmp.eq.s32.totalorder %s21, 7
    %p212 = por %p210, %p211
    %p214 = scmp.ne.s32.totalorder %s199, %s213
    %p215 = scmp.eq.s32.totalorder %s21, 0
    %p216 = por %p214, %p215
    %s217 = ssub.s32 %s15, %s22
    %p218 = scmp.eq.s32.totalorder %s217, 0
    %s220 = sadd.s32 %s219, 1
    %s221 = scalar_select %p218, %s219, %s220
    %p224 = pneg %p218
    %p225 = scmp.eq.s32.totalorder %s15, 7
    %p226 = por %p224, %p225
    %p227 = scmp.ne.s32.totalorder %s219, %s222
    %p228 = scmp.eq.s32.totalorder %s15, 0
    %p229 = por %p227, %p228
    %p230 = scmp.ne.s32.totalorder %s219, %s222
    %p231 = scmp.eq.s32.totalorder %s20, 7
    %p232 = por %p230, %p231
    %p233 = scmp.ne.s32.totalorder %s222, %s223
    %p234 = scmp.eq.s32.totalorder %s20, 0
    %p235 = por %p233, %p234
    %p236 = scmp.ne.s32.totalorder %s222, %s223
    %p237 = scmp.eq.s32.totalorder %s21, 7
    %p238 = por %p236, %p237
    %p240 = scmp.ne.s32.totalorder %s223, %s239
    %p241 = scmp.eq.s32.totalorder %s21, 0
    %p242 = por %p240, %p241
    %p243 = scmp.le.s32.totalorder 1, %s15
    %p244 = scmp.lt.s32.totalorder %s15, 9
    %p245 = pnand %p243, %p244
    %p246 = pneg %p245
    // Predicated region
    $region9: #{base_block_forward.1} parent=5 // pred_check
      _
    $region10: #{base_block_forward.1} parent=5 // pred_check_branch
      %248 = sbr.rel (%p245) target = $region12
    $region11: #{base_block_forward.1} parent=5 // pred_region
      %s249 = ssub.s32 %s15, 1
      // Predicated region
      $region13: #{base_block_forward.1} parent=11 // pred_check
        %p250 = pneg %p62
      $region14: #{base_block_forward.1} parent=11 // pred_check_branch
        %252 = sbr.rel (%p250) target = $region16
      $region15: #{base_block_forward.1} parent=11 // pred_region
        _
      $region16: #{base_block_forward.1} parent=11 // pred_fallthru
        _
      // Predicated region
      $region17: #{base_block_forward.1} parent=11 // pred_check
        %p253 = pneg %p83
      $region18: #{base_block_forward.1} parent=11 // pred_check_branch
        %255 = sbr.rel (%p253) target = $region20
      $region19: #{base_block_forward.1} parent=11 // pred_region
        _
      $region20: #{base_block_forward.1} parent=11 // pred_fallthru
        _
      // Predicated region
      $region21: #{base_block_forward.1} parent=11 // pred_check
        %p256 = pneg %p104
      $region22: #{base_block_forward.1} parent=11 // pred_check_branch
        %258 = sbr.rel (%p256) target = $region24
      $region23: #{base_block_forward.1} parent=11 // pred_region
        _
      $region24: #{base_block_forward.1} parent=11 // pred_fallthru
        _
      // Predicated region
      $region25: #{base_block_forward.1} parent=11 // pred_check
        %p259 = pneg %p125
      $region26: #{base_block_forward.1} parent=11 // pred_check_branch
        %261 = sbr.rel (%p259) target = $region28
      $region27: #{base_block_forward.1} parent=11 // pred_region
        _
      $region28: #{base_block_forward.1} parent=11 // pred_fallthru
        _
      // Predicated region
      $region29: #{base_block_forward.1} parent=11 // pred_check
        %p262 = pneg %p146
      $region30: #{base_block_forward.1} parent=11 // pred_check_branch
        %264 = sbr.rel (%p262) target = $region32
      $region31: #{base_block_forward.1} parent=11 // pred_region
        _
      $region32: #{base_block_forward.1} parent=11 // pred_fallthru
        _
      // Predicated region
      $region33: #{base_block_forward.1} parent=11 // pred_check
        %p265 = pneg %p167
      $region34: #{base_block_forward.1} parent=11 // pred_check_branch
        %267 = sbr.rel (%p265) target = $region36
      $region35: #{base_block_forward.1} parent=11 // pred_region
        _
      $region36: #{base_block_forward.1} parent=11 // pred_fallthru
        _
      // Predicated region
      $region37: #{base_block_forward.1} parent=11 // pred_check
        %p268 = pneg %p188
      $region38: #{base_block_forward.1} parent=11 // pred_check_branch
        %270 = sbr.rel (%p268) target = $region40
      $region39: #{base_block_forward.1} parent=11 // pred_region
        _
      $region40: #{base_block_forward.1} parent=11 // pred_fallthru
        _
      // Predicated region
      $region41: #{base_block_forward.1} parent=11 // pred_check
        %p271 = pneg %p209
      $region42: #{base_block_forward.1} parent=11 // pred_check_branch
        %273 = sbr.rel (%p271) target = $region44
      $region43: #{base_block_forward.1} parent=11 // pred_region
        _
      $region44: #{base_block_forward.1} parent=11 // pred_fallthru
        _
    $region12: #{base_block_forward.1} parent=5 // pred_fallthru
      _
    %p274 = scmp.lt.s32.totalorder %s15, 8
    // Predicated region
    $region45: #{base_block_forward.1} parent=5 // pred_check
      %p275 = pneg %p274
    $region46: #{base_block_forward.1} parent=5 // pred_check_branch
      %277 = sbr.rel (%p275) target = $region48
    $region47: #{base_block_forward.1} parent=5 // pred_region
      // Predicated region
      $region49: #{base_block_forward.1} parent=47 // pred_check
        %p278 = pneg %p35
      $region50: #{base_block_forward.1} parent=47 // pred_check_branch
        %280 = sbr.rel (%p278) target = $region52
      $region51: #{base_block_forward.1} parent=47 // pred_region
        %p281 = scmp.lt.s32.totalorder %s15, 7
        %s282 = scalar_select %p281, %s15, 7
        %s283 = smul.addr %s282, 32
        %s284 = smul.addr %s283, 8
        %s285 = scalar_lea.vmem %s0, %s284
      $region52: #{base_block_forward.1} parent=47 // pred_fallthru
        _
    $region48: #{base_block_forward.1} parent=5 // pred_fallthru
      _
    %p286 = scmp.le.s32.totalorder 1, %s15
    %p287 = scmp.lt.s32.totalorder %s15, 9
    %p288 = pnand %p286, %p287
    %p289 = pneg %p288
    // Predicated region
    $region53: #{base_block_forward.1} parent=5 // pred_check
      _
    $region54: #{base_block_forward.1} parent=5 // pred_check_branch
      %291 = sbr.rel (%p288) target = $region56
    $region55: #{base_block_forward.1} parent=5 // pred_region
      %s292 = ssub.s32 %s15, 1
      %p293 = scmp.lt.s32.totalorder %s20, 7
      %s294 = scalar_select %p293, %s20, 7
      %s295 = smul.addr %s294, 32
      %s296 = smul.addr %s295, 8
      %s297 = scalar_lea.vmem %s0, %s296
      %p298 = pneg %p41
      %p299 = pneg %p38
      %p300 = pneg %p62
      %p301 = pneg %p59
      %p302 = pneg %p83
      %p303 = pneg %p80
      %p304 = pneg %p104
      %p305 = pneg %p101
      %p306 = pneg %p125
      %p307 = pneg %p122
      %p308 = pneg %p146
      %p309 = pneg %p143
      %p310 = pneg %p167
      %p311 = pneg %p164
      %p312 = pneg %p188
      %p313 = pneg %p185
      %p314 = pneg %p209
      %p315 = pneg %p206
      %p316 = pneg %p235
      %p317 = pneg %p232
      %p318 = scmp.lt.s32.totalorder %s20, 7
      %s319 = scalar_select %p318, %s20, 7
      %s320 = smul.addr %s319, 2
      %s321 = smul.addr %s320, 8
      %s322 = scalar_lea.vmem %s9, %s321
      %p323 = scmp.lt.s32.totalorder %s20, 7
      %s324 = scalar_select %p323, %s20, 7
      %s325 = smul.addr %s324, 32
      %s326 = smul.addr %s325, 8
      %s327 = scalar_lea.vmem %s0, %s326
      %p328 = scmp.lt.s32.totalorder %s20, 7
      %s329 = scalar_select %p328, %s20, 7
      %s330 = smul.addr %s329, 2
      %s331 = smul.addr %s330, 8
      %s332 = scalar_lea.vmem %s9, %s331
      %v334 = vld [vmem:[%s327] sm:$0xff]
      %v335 = vld [vmem:[%s327 + $0x8] sm:$0xff]
      %v336 = vld [vmem:[%s327 + $0x10] sm:$0xff]
      %v337 = vld [vmem:[%s327 + $0x18] sm:$0xff]
      %v338 = vld [vmem:[%s327 + $0x20] sm:$0xff]
      %v339 = vld [vmem:[%s327 + $0x28] sm:$0xff]
      %v340 = vld [vmem:[%s327 + $0x30] sm:$0xff]
      %v341 = vld [vmem:[%s327 + $0x38] sm:$0xff]
      %v342 = vld [vmem:[%s327 + $0x40] sm:$0xff]
      %v343 = vld [vmem:[%s327 + $0x48] sm:$0xff]
      %v344 = vld [vmem:[%s327 + $0x50] sm:$0xff]
      %v345 = vld [vmem:[%s327 + $0x58] sm:$0xff]
      %v346 = vld [vmem:[%s327 + $0x60] sm:$0xff]
      %v347 = vld [vmem:[%s327 + $0x68] sm:$0xff]
      %v348 = vld [vmem:[%s327 + $0x70] sm:$0xff]
      %v349 = vld [vmem:[%s327 + $0x78] sm:$0xff]
      %v350 = vld [vmem:[%s327 + $0x80] sm:$0xff]
      %v351 = vld [vmem:[%s327 + $0x88] sm:$0xff]
      %v352 = vld [vmem:[%s327 + $0x90] sm:$0xff]
      %v353 = vld [vmem:[%s327 + $0x98] sm:$0xff]
      %v354 = vld [vmem:[%s327 + $0xa0] sm:$0xff]
      %v355 = vld [vmem:[%s327 + $0xa8] sm:$0xff]
      %v356 = vld [vmem:[%s327 + $0xb0] sm:$0xff]
      %v357 = vld [vmem:[%s327 + $0xb8] sm:$0xff]
      %v358 = vld [vmem:[%s327 + $0xc0] sm:$0xff]
      %v359 = vld [vmem:[%s327 + $0xc8] sm:$0xff]
      %v360 = vld [vmem:[%s327 + $0xd0] sm:$0xff]
      %v361 = vld [vmem:[%s327 + $0xd8] sm:$0xff]
      %v362 = vld [vmem:[%s327 + $0xe0] sm:$0xff]
      %v363 = vld [vmem:[%s327 + $0xe8] sm:$0xff]
      %v364 = vld [vmem:[%s327 + $0xf0] sm:$0xff]
      %v365 = vld [vmem:[%s327 + $0xf8] sm:$0xff]
      %v366 = vpack.c.bf16 %v335, %v334
      %v367 = vpack.c.bf16 %v337, %v336
      %v368 = vpack.c.bf16 %v339, %v338
      %v369 = vpack.c.bf16 %v341, %v340
      %v370 = vpack.c.bf16 %v343, %v342
      %v371 = vpack.c.bf16 %v345, %v344
      %v372 = vpack.c.bf16 %v347, %v346
      %v373 = vpack.c.bf16 %v349, %v348
      %v374 = vpack.c.bf16 %v351, %v350
      %v375 = vpack.c.bf16 %v353, %v352
      %v376 = vpack.c.bf16 %v355, %v354
      %v377 = vpack.c.bf16 %v357, %v356
      %v378 = vpack.c.bf16 %v359, %v358
      %v379 = vpack.c.bf16 %v361, %v360
      %v380 = vpack.c.bf16 %v363, %v362
      %v381 = vpack.c.bf16 %v365, %v364
      %v382 = vld [vmem:[%s1] sm:$0xf]
      %v383 = vld [vmem:[%s1 + $0x4] sm:$0xf]
      %v384 = vld [vmem:[%s2] sm:$0x1]
      %v386 = vperm.slane %v384, 0
      %v390 = vunpack.c.l.b16 %v382
      %v391 = vunpack.c.l.b16 %v383
      %v392 = vpack.c.b16 %v391, %v390
      %vm394 = vcmask 130048
      %v396 = vsel %vm394, %v366, 0
      %v399 = vsel %vm394, %v367, 0
      %v402 = vsel %vm394, %v368, 0
      %v405 = vsel %vm394, %v369, 0
      %v408 = vsel %vm394, %v370, 0
      %v411 = vsel %vm394, %v371, 0
      %v414 = vsel %vm394, %v372, 0
      %v417 = vsel %vm394, %v373, 0
      %v420 = vsel %vm394, %v374, 0
      %v423 = vsel %vm394, %v375, 0
      %v426 = vsel %vm394, %v376, 0
      %v429 = vsel %vm394, %v377, 0
      %v432 = vsel %vm394, %v378, 0
      %v435 = vsel %vm394, %v379, 0
      %v438 = vsel %vm394, %v380, 0
      %v441 = vsel %vm394, %v381, 0
      %443 = vmatpush.bf16.msra.mxu0 0
      %444 = vmatpush.bf16.msra.mxu0 0
      %445 = vmatpush.bf16.msra.mxu0 0
      %446 = vmatpush.bf16.msra.mxu0 0
      %447 = vmatpush.bf16.msra.mxu0 0
      %448 = vmatpush.bf16.msra.mxu0 0
      %449 = vmatpush.bf16.msra.mxu0 0
      %450 = vmatpush.bf16.msra.mxu0 %v392
      %451 = vmatmul.bf16.gmra.mxu0 %v396
      %v452 = vpop.f32.mrf.mxu0
      %v453 = vadd.f32 %v386, %v452
      %v454 = vpop.f32.mrf.mxu0
      %v455 = vadd.f32 %v386, %v454
      %456 = vmatmul.bf16.gmra.mxu0 %v399
      %v457 = vpop.f32.mrf.mxu0
      %v458 = vadd.f32 %v386, %v457
      %v459 = vpop.f32.mrf.mxu0
      %v460 = vadd.f32 %v386, %v459
      %461 = vmatmul.bf16.gmra.mxu0 %v402
      %v462 = vpop.f32.mrf.mxu0
      %v463 = vadd.f32 %v386, %v462
      %v464 = vpop.f32.mrf.mxu0
      %v465 = vadd.f32 %v386, %v464
      %466 = vmatmul.bf16.gmra.mxu0 %v405
      %v467 = vpop.f32.mrf.mxu0
      %v468 = vadd.f32 %v386, %v467
      %v469 = vpop.f32.mrf.mxu0
      %v470 = vadd.f32 %v386, %v469
      %471 = vmatmul.bf16.gmra.mxu0 %v408
      %v472 = vpop.f32.mrf.mxu0
      %v473 = vadd.f32 %v386, %v472
      %v474 = vpop.f32.mrf.mxu0
      %v475 = vadd.f32 %v386, %v474
      %476 = vmatmul.bf16.gmra.mxu0 %v411
      %v477 = vpop.f32.mrf.mxu0
      %v478 = vadd.f32 %v386, %v477
      %v479 = vpop.f32.mrf.mxu0
      %v480 = vadd.f32 %v386, %v479
      %481 = vmatmul.bf16.gmra.mxu0 %v414
      %v482 = vpop.f32.mrf.mxu0
      %v483 = vadd.f32 %v386, %v482
      %v484 = vpop.f32.mrf.mxu0
      %v485 = vadd.f32 %v386, %v484
      %486 = vmatmul.bf16.gmra.mxu0 %v417
      %v487 = vpop.f32.mrf.mxu0
      %v488 = vadd.f32 %v386, %v487
      %v489 = vpop.f32.mrf.mxu0
      %v490 = vadd.f32 %v386, %v489
      %491 = vmatmul.bf16.gmra.mxu0 %v420
      %v492 = vpop.f32.mrf.mxu0
      %v493 = vadd.f32 %v386, %v492
      %v494 = vpop.f32.mrf.mxu0
      %v495 = vadd.f32 %v386, %v494
      %496 = vmatmul.bf16.gmra.mxu0 %v423
      %v497 = vpop.f32.mrf.mxu0
      %v498 = vadd.f32 %v386, %v497
      %v499 = vpop.f32.mrf.mxu0
      %v500 = vadd.f32 %v386, %v499
      %501 = vmatmul.bf16.gmra.mxu0 %v426
      %v502 = vpop.f32.mrf.mxu0
      %v503 = vadd.f32 %v386, %v502
      %v504 = vpop.f32.mrf.mxu0
      %v505 = vadd.f32 %v386, %v504
      %506 = vmatmul.bf16.gmra.mxu0 %v429
      %v507 = vpop.f32.mrf.mxu0
      %v508 = vadd.f32 %v386, %v507
      %v509 = vpop.f32.mrf.mxu0
      %v510 = vadd.f32 %v386, %v509
      %511 = vmatmul.bf16.gmra.mxu0 %v432
      %v512 = vpop.f32.mrf.mxu0
      %v513 = vadd.f32 %v386, %v512
      %v514 = vpop.f32.mrf.mxu0
      %v515 = vadd.f32 %v386, %v514
      %516 = vmatmul.bf16.gmra.mxu0 %v435
      %v517 = vpop.f32.mrf.mxu0
      %v518 = vadd.f32 %v386, %v517
      %v519 = vpop.f32.mrf.mxu0
      %v520 = vadd.f32 %v386, %v519
      %521 = vmatmul.bf16.gmra.mxu0 %v438
      %v522 = vpop.f32.mrf.mxu0
      %v523 = vadd.f32 %v386, %v522
      %v524 = vpop.f32.mrf.mxu0
      %v525 = vadd.f32 %v386, %v524
      %526 = vmatmul.bf16.gmra.mxu0 %v441
      %v527 = vpop.f32.mrf.mxu0
      %v528 = vadd.f32 %v386, %v527
      %v529 = vpop.f32.mrf.mxu0
      %v530 = vadd.f32 %v386, %v529
      %531 = vdwg.mxu0
      %v532 = vmax.f32 %v453, 0.0
      %v533 = vmax.f32 %v455, 0.0
      %v534 = vmax.f32 %v458, 0.0
      %v535 = vmax.f32 %v460, 0.0
      %v536 = vmax.f32 %v463, 0.0
      %v537 = vmax.f32 %v465, 0.0
      %v538 = vmax.f32 %v468, 0.0
      %v539 = vmax.f32 %v470, 0.0
      %v540 = vmax.f32 %v473, 0.0
      %v541 = vmax.f32 %v475, 0.0
      %v542 = vmax.f32 %v478, 0.0
      %v543 = vmax.f32 %v480, 0.0
      %v544 = vmax.f32 %v483, 0.0
      %v545 = vmax.f32 %v485, 0.0
      %v546 = vmax.f32 %v488, 0.0
      %v547 = vmax.f32 %v490, 0.0
      %v548 = vmax.f32 %v493, 0.0
      %v549 = vmax.f32 %v495, 0.0
      %v550 = vmax.f32 %v498, 0.0
      %v551 = vmax.f32 %v500, 0.0
      %v552 = vmax.f32 %v503, 0.0
      %v553 = vmax.f32 %v505, 0.0
      %v554 = vmax.f32 %v508, 0.0
      %v555 = vmax.f32 %v510, 0.0
      %v556 = vmax.f32 %v513, 0.0
      %v557 = vmax.f32 %v515, 0.0
      %v558 = vmax.f32 %v518, 0.0
      %v559 = vmax.f32 %v520, 0.0
      %v560 = vmax.f32 %v523, 0.0
      %v561 = vmax.f32 %v525, 0.0
      %v562 = vmax.f32 %v528, 0.0
      %v563 = vmax.f32 %v530, 0.0
      %vm564 = vcmask 64512
      %565 = vst.msk [vmem:[#allocation2] sm:$0xff] %vm564, 0.0
      %566 = vst.msk [vmem:[#allocation2 + $0x8] sm:$0xff] %vm564, 0.0
      %vm567 = vcmask 58368
      %568 = vst.msk [vmem:[#allocation2 + $0x10] sm:$0x3] %vm567, 0.0
      %s569 = scalar_lea.vmem [#allocation2], 408
      %570 = vst.msk [vmem:[%s569] sm:$0xff] %vm564, 0.0
      %571 = vst.msk [vmem:[%s569 + $0x8] sm:$0xff] %vm564, 0.0
      %572 = vst.msk [vmem:[%s569 + $0x10] sm:$0x3] %vm567, 0.0
      %vm573 = vcmask 57344
      %574 = vst.msk [vmem:[#allocation2] sm:$0x1] %vm573, 0.0
      %575 = vst.msk [vmem:[#allocation2 + $0x18] sm:$0x1] %vm573, 0.0
      %576 = vst.msk [vmem:[#allocation2 + $0x30] sm:$0x1] %vm573, 0.0
      %577 = vst.msk [vmem:[#allocation2 + $0x48] sm:$0x1] %vm573, 0.0
      %578 = vst.msk [vmem:[#allocation2 + $0x60] sm:$0x1] %vm573, 0.0
      %579 = vst.msk [vmem:[#allocation2 + $0x78] sm:$0x1] %vm573, 0.0
      %580 = vst.msk [vmem:[#allocation2 + $0x90] sm:$0x1] %vm573, 0.0
      %581 = vst.msk [vmem:[#allocation2 + $0xa8] sm:$0x1] %vm573, 0.0
      %582 = vst.msk [vmem:[#allocation2 + $0xc0] sm:$0x1] %vm573, 0.0
      %583 = vst.msk [vmem:[#allocation2 + $0xd8] sm:$0x1] %vm573, 0.0
      %584 = vst.msk [vmem:[#allocation2 + $0xf0] sm:$0x1] %vm573, 0.0
      %585 = vst.msk [vmem:[#allocation2 + $0x108] sm:$0x1] %vm573, 0.0
      %586 = vst.msk [vmem:[#allocation2 + $0x120] sm:$0x1] %vm573, 0.0
      %587 = vst.msk [vmem:[#allocation2 + $0x138] sm:$0x1] %vm573, 0.0
      %588 = vst.msk [vmem:[#allocation2 + $0x150] sm:$0x1] %vm573, 0.0
      %589 = vst.msk [vmem:[#allocation2 + $0x168] sm:$0x1] %vm573, 0.0
      %590 = vst.msk [vmem:[#allocation2 + $0x180] sm:$0x1] %vm573, 0.0
      %591 = vst.msk [vmem:[#allocation2 + $0x198] sm:$0x1] %vm573, 0.0
      %592 = vst.msk [vmem:[#allocation2 + $0x11] sm:$0x1] %vm573, 0.0
      %593 = vst.msk [vmem:[#allocation2 + $0x29] sm:$0x1] %vm573, 0.0
      %594 = vst.msk [vmem:[#allocation2 + $0x41] sm:$0x1] %vm573, 0.0
      %595 = vst.msk [vmem:[#allocation2 + $0x59] sm:$0x1] %vm573, 0.0
      %596 = vst.msk [vmem:[#allocation2 + $0x71] sm:$0x1] %vm573, 0.0
      %597 = vst.msk [vmem:[#allocation2 + $0x89] sm:$0x1] %vm573, 0.0
      %598 = vst.msk [vmem:[#allocation2 + $0xa1] sm:$0x1] %vm573, 0.0
      %599 = vst.msk [vmem:[#allocation2 + $0xb9] sm:$0x1] %vm573, 0.0
      %600 = vst.msk [vmem:[#allocation2 + $0xd1] sm:$0x1] %vm573, 0.0
      %601 = vst.msk [vmem:[#allocation2 + $0xe9] sm:$0x1] %vm573, 0.0
      %602 = vst.msk [vmem:[#allocation2 + $0x101] sm:$0x1] %vm573, 0.0
      %603 = vst.msk [vmem:[#allocation2 + $0x119] sm:$0x1] %vm573, 0.0
      %604 = vst.msk [vmem:[#allocation2 + $0x131] sm:$0x1] %vm573, 0.0
      %605 = vst.msk [vmem:[#allocation2 + $0x149] sm:$0x1] %vm573, 0.0
      %606 = vst.msk [vmem:[#allocation2 + $0x161] sm:$0x1] %vm573, 0.0
      %607 = vst.msk [vmem:[#allocation2 + $0x179] sm:$0x1] %vm573, 0.0
      %608 = vst.msk [vmem:[#allocation2 + $0x191] sm:$0x1] %vm573, 0.0
      %609 = vst.msk [vmem:[#allocation2 + $0x1a9] sm:$0x1] %vm573, 0.0
      %s610 = scalar_lea.vmem [#allocation2], 24
      %611 = vst.msk [vmem:[%s610 + $0x1] sm:$0xff] %vm564, %v532
      %612 = vst.msk [vmem:[%s610 + $0x9] sm:$0xff] %vm564, %v533
      %613 = vst.msk [vmem:[%s610 + $0x19] sm:$0xff] %vm564, %v534
      %614 = vst.msk [vmem:[%s610 + $0x21] sm:$0xff] %vm564, %v535
      %615 = vst.msk [vmem:[%s610 + $0x31] sm:$0xff] %vm564, %v536
      %616 = vst.msk [vmem:[%s610 + $0x39] sm:$0xff] %vm564, %v537
      %617 = vst.msk [vmem:[%s610 + $0x49] sm:$0xff] %vm564, %v538
      %618 = vst.msk [vmem:[%s610 + $0x51] sm:$0xff] %vm564, %v539
      %619 = vst.msk [vmem:[%s610 + $0x61] sm:$0xff] %vm564, %v540
      %620 = vst.msk [vmem:[%s610 + $0x69] sm:$0xff] %vm564, %v541
      %621 = vst.msk [vmem:[%s610 + $0x79] sm:$0xff] %vm564, %v542
      %622 = vst.msk [vmem:[%s610 + $0x81] sm:$0xff] %vm564, %v543
      %623 = vst.msk [vmem:[%s610 + $0x91] sm:$0xff] %vm564, %v544
      %624 = vst.msk [vmem:[%s610 + $0x99] sm:$0xff] %vm564, %v545
      %625 = vst.msk [vmem:[%s610 + $0xa9] sm:$0xff] %vm564, %v546
      %626 = vst.msk [vmem:[%s610 + $0xb1] sm:$0xff] %vm564, %v547
      %627 = vst.msk [vmem:[%s610 + $0xc1] sm:$0xff] %vm564, %v548
      %628 = vst.msk [vmem:[%s610 + $0xc9] sm:$0xff] %vm564, %v549
      %629 = vst.msk [vmem:[%s610 + $0xd9] sm:$0xff] %vm564, %v550
      %630 = vst.msk [vmem:[%s610 + $0xe1] sm:$0xff] %vm564, %v551
      %631 = vst.msk [vmem:[%s610 + $0xf1] sm:$0xff] %vm564, %v552
      %632 = vst.msk [vmem:[%s610 + $0xf9] sm:$0xff] %vm564, %v553
      %633 = vst.msk [vmem:[%s610 + $0x109] sm:$0xff] %vm564, %v554
      %634 = vst.msk [vmem:[%s610 + $0x111] sm:$0xff] %vm564, %v555
      %635 = vst.msk [vmem:[%s610 + $0x121] sm:$0xff] %vm564, %v556
      %636 = vst.msk [vmem:[%s610 + $0x129] sm:$0xff] %vm564, %v557
      %637 = vst.msk [vmem:[%s610 + $0x139] sm:$0xff] %vm564, %v558
      %638 = vst.msk [vmem:[%s610 + $0x141] sm:$0xff] %vm564, %v559
      %639 = vst.msk [vmem:[%s610 + $0x151] sm:$0xff] %vm564, %v560
      %640 = vst.msk [vmem:[%s610 + $0x159] sm:$0xff] %vm564, %v561
      %641 = vst.msk [vmem:[%s610 + $0x169] sm:$0xff] %vm564, %v562
      %642 = vst.msk [vmem:[%s610 + $0x171] sm:$0xff] %vm564, %v563
      %v643 = vld [vmem:[#allocation2] ss:$2 sm:$0xff]
      %s644 = scalar_lea.vmem [#allocation2], 48
      %v645 = vld [vmem:[%s644] ss:$2 sm:$0xff]
      %s646 = scalar_lea.vmem [#allocation2], 96
      %v647 = vld [vmem:[%s646] ss:$2 sm:$0xff]
      %s648 = scalar_lea.vmem [#allocation2], 144
      %v649 = vld [vmem:[%s648] ss:$2 sm:$0xff]
      %s650 = scalar_lea.vmem [#allocation2], 192
      %v651 = vld [vmem:[%s650] ss:$2 sm:$0xff]
      %s652 = scalar_lea.vmem [#allocation2], 240
      %v653 = vld [vmem:[%s652] ss:$2 sm:$0xff]
      %s654 = scalar_lea.vmem [#allocation2], 288
      %v655 = vld [vmem:[%s654] ss:$2 sm:$0xff]
      %s656 = scalar_lea.vmem [#allocation2], 336
      %v657 = vld [vmem:[%s656] ss:$2 sm:$0xff]
      %658 = vst.msk [vmem:[#allocation3] sm:$0xff] %vm564, %v643
      %659 = vst.msk [vmem:[#allocation3 + $0x8] sm:$0xff] %vm564, %v645
      %660 = vst.msk [vmem:[#allocation3 + $0x10] sm:$0xff] %vm564, %v647
      %661 = vst.msk [vmem:[#allocation3 + $0x18] sm:$0xff] %vm564, %v649
      %662 = vst.msk [vmem:[#allocation3 + $0x20] sm:$0xff] %vm564, %v651
      %663 = vst.msk [vmem:[#allocation3 + $0x28] sm:$0xff] %vm564, %v653
      %664 = vst.msk [vmem:[#allocation3 + $0x30] sm:$0xff] %vm564, %v655
      %665 = vst.msk [vmem:[#allocation3 + $0x38] sm:$0xff] %vm564, %v657
      %s666 = scalar_lea.vmem [#allocation2], 1
      %v667 = vld [vmem:[%s666] ss:$2 sm:$0xff]
      %s668 = scalar_lea.vmem [#allocation2], 49
      %v669 = vld [vmem:[%s668] ss:$2 sm:$0xff]
      %s670 = scalar_lea.vmem [#allocation2], 97
      %v671 = vld [vmem:[%s670] ss:$2 sm:$0xff]
      %s672 = scalar_lea.vmem [#allocation2], 145
      %v673 = vld [vmem:[%s672] ss:$2 sm:$0xff]
      %s674 = scalar_lea.vmem [#allocation2], 193
      %v675 = vld [vmem:[%s674] ss:$2 sm:$0xff]
      %s676 = scalar_lea.vmem [#allocation2], 241
      %v677 = vld [vmem:[%s676] ss:$2 sm:$0xff]
      %s678 = scalar_lea.vmem [#allocation2], 289
      %v679 = vld [vmem:[%s678] ss:$2 sm:$0xff]
      %s680 = scalar_lea.vmem [#allocation2], 337
      %v681 = vld [vmem:[%s680] ss:$2 sm:$0xff]
      %690 = vrot.lane.b32.xlu0 %v667, 8
      %v691 = vpop.permute.xlu0 %690
      %692 = vrot.lane.b32.xlu0 %v669, 8
      %v693 = vpop.permute.xlu0 %692
      %694 = vrot.lane.b32.xlu0 %v671, 8
      %v695 = vpop.permute.xlu0 %694
      %696 = vrot.lane.b32.xlu0 %v673, 8
      %v697 = vpop.permute.xlu0 %696
      %698 = vrot.lane.b32.xlu0 %v675, 8
      %v699 = vpop.permute.xlu0 %698
      %700 = vrot.lane.b32.xlu0 %v677, 8
      %v701 = vpop.permute.xlu0 %700
      %702 = vrot.lane.b32.xlu0 %v679, 8
      %v703 = vpop.permute.xlu0 %702
      %704 = vrot.lane.b32.xlu0 %v681, 8
      %v705 = vpop.permute.xlu0 %704
      %vm714 = vcmask 130112
      %715 = vst.msk [vmem:[#allocation3] sm:$0xff] %vm714, %v691
      %716 = vst.msk [vmem:[#allocation3 + $0x8] sm:$0xff] %vm714, %v693
      %717 = vst.msk [vmem:[#allocation3 + $0x10] sm:$0xff] %vm714, %v695
      %718 = vst.msk [vmem:[#allocation3 + $0x18] sm:$0xff] %vm714, %v697
      %719 = vst.msk [vmem:[#allocation3 + $0x20] sm:$0xff] %vm714, %v699
      %720 = vst.msk [vmem:[#allocation3 + $0x28] sm:$0xff] %vm714, %v701
      %721 = vst.msk [vmem:[#allocation3 + $0x30] sm:$0xff] %vm714, %v703
      %722 = vst.msk [vmem:[#allocation3 + $0x38] sm:$0xff] %vm714, %v705
      %s723 = scalar_lea.vmem [#allocation2], 2
      %v724 = vld [vmem:[%s723] ss:$2 sm:$0xff]
      %s725 = scalar_lea.vmem [#allocation2], 50
      %v726 = vld [vmem:[%s725] ss:$2 sm:$0xff]
      %s727 = scalar_lea.vmem [#allocation2], 98
      %v728 = vld [vmem:[%s727] ss:$2 sm:$0xff]
      %s729 = scalar_lea.vmem [#allocation2], 146
      %v730 = vld [vmem:[%s729] ss:$2 sm:$0xff]
      %s731 = scalar_lea.vmem [#allocation2], 194
      %v732 = vld [vmem:[%s731] ss:$2 sm:$0xff]
      %s733 = scalar_lea.vmem [#allocation2], 242
      %v734 = vld [vmem:[%s733] ss:$2 sm:$0xff]
      %s735 = scalar_lea.vmem [#allocation2], 290
      %v736 = vld [vmem:[%s735] ss:$2 sm:$0xff]
      %s737 = scalar_lea.vmem [#allocation2], 338
      %v738 = vld [vmem:[%s737] ss:$2 sm:$0xff]
      %747 = vrot.lane.b32.xlu0 %v724, 16
      %v748 = vpop.permute.xlu0 %747
      %749 = vrot.lane.b32.xlu0 %v726, 16
      %v750 = vpop.permute.xlu0 %749
      %751 = vrot.lane.b32.xlu0 %v728, 16
      %v752 = vpop.permute.xlu0 %751
      %753 = vrot.lane.b32.xlu0 %v730, 16
      %v754 = vpop.permute.xlu0 %753
      %755 = vrot.lane.b32.xlu0 %v732, 16
      %v756 = vpop.permute.xlu0 %755
      %757 = vrot.lane.b32.xlu0 %v734, 16
      %v758 = vpop.permute.xlu0 %757
      %759 = vrot.lane.b32.xlu0 %v736, 16
      %v760 = vpop.permute.xlu0 %759
      %761 = vrot.lane.b32.xlu0 %v738, 16
      %v762 = vpop.permute.xlu0 %761
      %vm771 = vcmask 195712
      %772 = vst.msk [vmem:[#allocation3] sm:$0xff] %vm771, %v748
      %773 = vst.msk [vmem:[#allocation3 + $0x8] sm:$0xff] %vm771, %v750
      %774 = vst.msk [vmem:[#allocation3 + $0x10] sm:$0xff] %vm771, %v752
      %775 = vst.msk [vmem:[#allocation3 + $0x18] sm:$0xff] %vm771, %v754
      %776 = vst.msk [vmem:[#allocation3 + $0x20] sm:$0xff] %vm771, %v756
      %777 = vst.msk [vmem:[#allocation3 + $0x28] sm:$0xff] %vm771, %v758
      %778 = vst.msk [vmem:[#allocation3 + $0x30] sm:$0xff] %vm771, %v760
      %779 = vst.msk [vmem:[#allocation3 + $0x38] sm:$0xff] %vm771, %v762
      %v780 = vld [vmem:[%s610] ss:$2 sm:$0xff]
      %s781 = scalar_lea.vmem %s610, 48 [#allocation2]
      %v782 = vld [vmem:[%s781] ss:$2 sm:$0xff]
      %s783 = scalar_lea.vmem %s610, 96 [#allocation2]
      %v784 = vld [vmem:[%s783] ss:$2 sm:$0xff]
      %s785 = scalar_lea.vmem %s610, 144 [#allocation2]
      %v786 = vld [vmem:[%s785] ss:$2 sm:$0xff]
      %s787 = scalar_lea.vmem %s610, 192 [#allocation2]
      %v788 = vld [vmem:[%s787] ss:$2 sm:$0xff]
      %s789 = scalar_lea.vmem %s610, 240 [#allocation2]
      %v790 = vld [vmem:[%s789] ss:$2 sm:$0xff]
      %s791 = scalar_lea.vmem %s610, 288 [#allocation2]
      %v792 = vld [vmem:[%s791] ss:$2 sm:$0xff]
      %s793 = scalar_lea.vmem %s610, 336 [#allocation2]
      %v794 = vld [vmem:[%s793] ss:$2 sm:$0xff]
      %803 = vrot.lane.b32.xlu0 %v780, 24
      %v804 = vpop.permute.xlu0 %803
      %805 = vrot.lane.b32.xlu0 %v782, 24
      %v806 = vpop.permute.xlu0 %805
      %807 = vrot.lane.b32.xlu0 %v784, 24
      %v808 = vpop.permute.xlu0 %807
      %809 = vrot.lane.b32.xlu0 %v786, 24
      %v810 = vpop.permute.xlu0 %809
      %811 = vrot.lane.b32.xlu0 %v788, 24
      %v812 = vpop.permute.xlu0 %811
      %813 = vrot.lane.b32.xlu0 %v790, 24
      %v814 = vpop.permute.xlu0 %813
      %815 = vrot.lane.b32.xlu0 %v792, 24
      %v816 = vpop.permute.xlu0 %815
      %817 = vrot.lane.b32.xlu0 %v794, 24
      %v818 = vpop.permute.xlu0 %817
      %vm827 = vcmask 261312
      %828 = vst.msk [vmem:[#allocation3] sm:$0xff] %vm827, %v804
      %829 = vst.msk [vmem:[#allocation3 + $0x8] sm:$0xff] %vm827, %v806
      %830 = vst.msk [vmem:[#allocation3 + $0x10] sm:$0xff] %vm827, %v808
      %831 = vst.msk [vmem:[#allocation3 + $0x18] sm:$0xff] %vm827, %v810
      %832 = vst.msk [vmem:[#allocation3 + $0x20] sm:$0xff] %vm827, %v812
      %833 = vst.msk [vmem:[#allocation3 + $0x28] sm:$0xff] %vm827, %v814
      %834 = vst.msk [vmem:[#allocation3 + $0x30] sm:$0xff] %vm827, %v816
      %835 = vst.msk [vmem:[#allocation3 + $0x38] sm:$0xff] %vm827, %v818
      %s836 = scalar_lea.vmem %s610, 1 [#allocation2]
      %v837 = vld [vmem:[%s836] ss:$2 sm:$0xff]
      %s838 = scalar_lea.vmem %s610, 49 [#allocation2]
      %v839 = vld [vmem:[%s838] ss:$2 sm:$0xff]
      %s840 = scalar_lea.vmem %s610, 97 [#allocation2]
      %v841 = vld [vmem:[%s840] ss:$2 sm:$0xff]
      %s842 = scalar_lea.vmem %s610, 145 [#allocation2]
      %v843 = vld [vmem:[%s842] ss:$2 sm:$0xff]
      %s844 = scalar_lea.vmem %s610, 193 [#allocation2]
      %v845 = vld [vmem:[%s844] ss:$2 sm:$0xff]
      %s846 = scalar_lea.vmem %s610, 241 [#allocation2]
      %v847 = vld [vmem:[%s846] ss:$2 sm:$0xff]
      %s848 = scalar_lea.vmem %s610, 289 [#allocation2]
      %v849 = vld [vmem:[%s848] ss:$2 sm:$0xff]
      %s850 = scalar_lea.vmem %s610, 337 [#allocation2]
      %v851 = vld [vmem:[%s850] ss:$2 sm:$0xff]
      %860 = vrot.lane.b32.xlu0 %v837, 32
      %v861 = vpop.permute.xlu0 %860
      %862 = vrot.lane.b32.xlu0 %v839, 32
      %v863 = vpop.permute.xlu0 %862
      %864 = vrot.lane.b32.xlu0 %v841, 32
      %v865 = vpop.permute.xlu0 %864
      %866 = vrot.lane.b32.xlu0 %v843, 32
      %v867 = vpop.permute.xlu0 %866
      %868 = vrot.lane.b32.xlu0 %v845, 32
      %v869 = vpop.permute.xlu0 %868
      %870 = vrot.lane.b32.xlu0 %v847, 32
      %v871 = vpop.permute.xlu0 %870
      %872 = vrot.lane.b32.xlu0 %v849, 32
      %v873 = vpop.permute.xlu0 %872
      %874 = vrot.lane.b32.xlu0 %v851, 32
      %v875 = vpop.permute.xlu0 %874
      %vm884 = vcmask 326912
      %885 = vst.msk [vmem:[#allocation3] sm:$0xff] %vm884, %v861
      %886 = vst.msk [vmem:[#allocation3 + $0x8] sm:$0xff] %vm884, %v863
      %887 = vst.msk [vmem:[#allocation3 + $0x10] sm:$0xff] %vm884, %v865
      %888 = vst.msk [vmem:[#allocation3 + $0x18] sm:$0xff] %vm884, %v867
      %889 = vst.msk [vmem:[#allocation3 + $0x20] sm:$0xff] %vm884, %v869
      %890 = vst.msk [vmem:[#allocation3 + $0x28] sm:$0xff] %vm884, %v871
      %891 = vst.msk [vmem:[#allocation3 + $0x30] sm:$0xff] %vm884, %v873
      %892 = vst.msk [vmem:[#allocation3 + $0x38] sm:$0xff] %vm884, %v875
      %s893 = scalar_lea.vmem %s610, 2 [#allocation2]
      %v894 = vld [vmem:[%s893] ss:$2 sm:$0xff]
      %s895 = scalar_lea.vmem %s610, 50 [#allocation2]
      %v896 = vld [vmem:[%s895] ss:$2 sm:$0xff]
      %s897 = scalar_lea.vmem %s610, 98 [#allocation2]
      %v898 = vld [vmem:[%s897] ss:$2 sm:$0xff]
      %s899 = scalar_lea.vmem %s610, 146 [#allocation2]
      %v900 = vld [vmem:[%s899] ss:$2 sm:$0xff]
      %s901 = scalar_lea.vmem %s610, 194 [#allocation2]
      %v902 = vld [vmem:[%s901] ss:$2 sm:$0xff]
      %s903 = scalar_lea.vmem %s610, 242 [#allocation2]
      %v904 = vld [vmem:[%s903] ss:$2 sm:$0xff]
      %s905 = scalar_lea.vmem %s610, 290 [#allocation2]
      %v906 = vld [vmem:[%s905] ss:$2 sm:$0xff]
      %s907 = scalar_lea.vmem %s610, 338 [#allocation2]
      %v908 = vld [vmem:[%s907] ss:$2 sm:$0xff]
      %917 = vrot.lane.b32.xlu0 %v894, 40
      %v918 = vpop.permute.xlu0 %917
      %919 = vrot.lane.b32.xlu0 %v896, 40
      %v920 = vpop.permute.xlu0 %919
      %921 = vrot.lane.b32.xlu0 %v898, 40
      %v922 = vpop.permute.xlu0 %921
      %923 = vrot.lane.b32.xlu0 %v900, 40
      %v924 = vpop.permute.xlu0 %923
      %925 = vrot.lane.b32.xlu0 %v902, 40
      %v926 = vpop.permute.xlu0 %925
      %927 = vrot.lane.b32.xlu0 %v904, 40
      %v928 = vpop.permute.xlu0 %927
      %929 = vrot.lane.b32.xlu0 %v906, 40
      %v930 = vpop.permute.xlu0 %929
      %931 = vrot.lane.b32.xlu0 %v908, 40
      %v932 = vpop.permute.xlu0 %931
      %vm941 = vcmask 392512
      %942 = vst.msk [vmem:[#allocation3] sm:$0xff] %vm941, %v918
      %943 = vst.msk [vmem:[#allocation3 + $0x8] sm:$0xff] %vm941, %v920
      %944 = vst.msk [vmem:[#allocation3 + $0x10] sm:$0xff] %vm941, %v922
      %945 = vst.msk [vmem:[#allocation3 + $0x18] sm:$0xff] %vm941, %v924
      %946 = vst.msk [vmem:[#allocation3 + $0x20] sm:$0xff] %vm941, %v926
      %947 = vst.msk [vmem:[#allocation3 + $0x28] sm:$0xff] %vm941, %v928
      %948 = vst.msk [vmem:[#allocation3 + $0x30] sm:$0xff] %vm941, %v930
      %949 = vst.msk [vmem:[#allocation3 + $0x38] sm:$0xff] %vm941, %v932
      %s950 = scalar_lea.vmem [#allocation2], 48
      %v951 = vld [vmem:[%s950] ss:$2 sm:$0xff]
      %s952 = scalar_lea.vmem %s950, 48 [#allocation2]
      %v953 = vld [vmem:[%s952] ss:$2 sm:$0xff]
      %s954 = scalar_lea.vmem %s950, 96 [#allocation2]
      %v955 = vld [vmem:[%s954] ss:$2 sm:$0xff]
      %s956 = scalar_lea.vmem %s950, 144 [#allocation2]
      %v957 = vld [vmem:[%s956] ss:$2 sm:$0xff]
      %s958 = scalar_lea.vmem %s950, 192 [#allocation2]
      %v959 = vld [vmem:[%s958] ss:$2 sm:$0xff]
      %s960 = scalar_lea.vmem %s950, 240 [#allocation2]
      %v961 = vld [vmem:[%s960] ss:$2 sm:$0xff]
      %s962 = scalar_lea.vmem %s950, 288 [#allocation2]
      %v963 = vld [vmem:[%s962] ss:$2 sm:$0xff]
      %s964 = scalar_lea.vmem %s950, 336 [#allocation2]
      %v965 = vld [vmem:[%s964] ss:$2 sm:$0xff]
      %974 = vrot.lane.b32.xlu0 %v951, 48
      %v975 = vpop.permute.xlu0 %974
      %976 = vrot.lane.b32.xlu0 %v953, 48
      %v977 = vpop.permute.xlu0 %976
      %978 = vrot.lane.b32.xlu0 %v955, 48
      %v979 = vpop.permute.xlu0 %978
      %980 = vrot.lane.b32.xlu0 %v957, 48
      %v981 = vpop.permute.xlu0 %980
      %982 = vrot.lane.b32.xlu0 %v959, 48
      %v983 = vpop.permute.xlu0 %982
      %984 = vrot.lane.b32.xlu0 %v961, 48
      %v985 = vpop.permute.xlu0 %984
      %986 = vrot.lane.b32.xlu0 %v963, 48
      %v987 = vpop.permute.xlu0 %986
      %988 = vrot.lane.b32.xlu0 %v965, 48
      %v989 = vpop.permute.xlu0 %988
      %vm998 = vcmask 458112
      %999 = vst.msk [vmem:[#allocation3] sm:$0xff] %vm998, %v975
      %1000 = vst.msk [vmem:[#allocation3 + $0x8] sm:$0xff] %vm998, %v977
      %1001 = vst.msk [vmem:[#allocation3 + $0x10] sm:$0xff] %vm998, %v979
      %1002 = vst.msk [vmem:[#allocation3 + $0x18] sm:$0xff] %vm998, %v981
      %1003 = vst.msk [vmem:[#allocation3 + $0x20] sm:$0xff] %vm998, %v983
      %1004 = vst.msk [vmem:[#allocation3 + $0x28] sm:$0xff] %vm998, %v985
      %1005 = vst.msk [vmem:[#allocation3 + $0x30] sm:$0xff] %vm998, %v987
      %1006 = vst.msk [vmem:[#allocation3 + $0x38] sm:$0xff] %vm998, %v989
      %s1007 = scalar_lea.vmem %s950, 1 [#allocation2]
      %v1008 = vld [vmem:[%s1007] ss:$2 sm:$0xff]
      %s1009 = scalar_lea.vmem %s950, 49 [#allocation2]
      %v1010 = vld [vmem:[%s1009] ss:$2 sm:$0xff]
      %s1011 = scalar_lea.vmem %s950, 97 [#allocation2]
      %v1012 = vld [vmem:[%s1011] ss:$2 sm:$0xff]
      %s1013 = scalar_lea.vmem %s950, 145 [#allocation2]
      %v1014 = vld [vmem:[%s1013] ss:$2 sm:$0xff]
      %s1015 = scalar_lea.vmem %s950, 193 [#allocation2]
      %v1016 = vld [vmem:[%s1015] ss:$2 sm:$0xff]
      %s1017 = scalar_lea.vmem %s950, 241 [#allocation2]
      %v1018 = vld [vmem:[%s1017] ss:$2 sm:$0xff]
      %s1019 = scalar_lea.vmem %s950, 289 [#allocation2]
      %v1020 = vld [vmem:[%s1019] ss:$2 sm:$0xff]
      %s1021 = scalar_lea.vmem %s950, 337 [#allocation2]
      %v1022 = vld [vmem:[%s1021] ss:$2 sm:$0xff]
      %1031 = vrot.lane.b32.xlu0 %v1008, 56
      %v1032 = vpop.permute.xlu0 %1031
      %1033 = vrot.lane.b32.xlu0 %v1010, 56
      %v1034 = vpop.permute.xlu0 %1033
      %1035 = vrot.lane.b32.xlu0 %v1012, 56
      %v1036 = vpop.permute.xlu0 %1035
      %1037 = vrot.lane.b32.xlu0 %v1014, 56
      %v1038 = vpop.permute.xlu0 %1037
      %1039 = vrot.lane.b32.xlu0 %v1016, 56
      %v1040 = vpop.permute.xlu0 %1039
      %1041 = vrot.lane.b32.xlu0 %v1018, 56
      %v1042 = vpop.permute.xlu0 %1041
      %1043 = vrot.lane.b32.xlu0 %v1020, 56
      %v1044 = vpop.permute.xlu0 %1043
      %1045 = vrot.lane.b32.xlu0 %v1022, 56
      %v1046 = vpop.permute.xlu0 %1045
      %vm1055 = vcmask 523712
      %1056 = vst.msk [vmem:[#allocation3] sm:$0xff] %vm1055, %v1032
      %1057 = vst.msk [vmem:[#allocation3 + $0x8] sm:$0xff] %vm1055, %v1034
      %1058 = vst.msk [vmem:[#allocation3 + $0x10] sm:$0xff] %vm1055, %v1036
      %1059 = vst.msk [vmem:[#allocation3 + $0x18] sm:$0xff] %vm1055, %v1038
      %1060 = vst.msk [vmem:[#allocation3 + $0x20] sm:$0xff] %vm1055, %v1040
      %1061 = vst.msk [vmem:[#allocation3 + $0x28] sm:$0xff] %vm1055, %v1042
      %1062 = vst.msk [vmem:[#allocation3 + $0x30] sm:$0xff] %vm1055, %v1044
      %1063 = vst.msk [vmem:[#allocation3 + $0x38] sm:$0xff] %vm1055, %v1046
      %s1064 = scalar_lea.vmem %s950, 2 [#allocation2]
      %v1065 = vld [vmem:[%s1064] ss:$2 sm:$0xff]
      %s1066 = scalar_lea.vmem %s950, 50 [#allocation2]
      %v1067 = vld [vmem:[%s1066] ss:$2 sm:$0xff]
      %s1068 = scalar_lea.vmem %s950, 98 [#allocation2]
      %v1069 = vld [vmem:[%s1068] ss:$2 sm:$0xff]
      %s1070 = scalar_lea.vmem %s950, 146 [#allocation2]
      %v1071 = vld [vmem:[%s1070] ss:$2 sm:$0xff]
      %s1072 = scalar_lea.vmem %s950, 194 [#allocation2]
      %v1073 = vld [vmem:[%s1072] ss:$2 sm:$0xff]
      %s1074 = scalar_lea.vmem %s950, 242 [#allocation2]
      %v1075 = vld [vmem:[%s1074] ss:$2 sm:$0xff]
      %s1076 = scalar_lea.vmem %s950, 290 [#allocation2]
      %v1077 = vld [vmem:[%s1076] ss:$2 sm:$0xff]
      %s1078 = scalar_lea.vmem %s950, 338 [#allocation2]
      %v1079 = vld [vmem:[%s1078] ss:$2 sm:$0xff]
      %1088 = vrot.lane.b32.xlu0 %v1065, 64
      %v1089 = vpop.permute.xlu0 %1088
      %1090 = vrot.lane.b32.xlu0 %v1067, 64
      %v1091 = vpop.permute.xlu0 %1090
      %1092 = vrot.lane.b32.xlu0 %v1069, 64
      %v1093 = vpop.permute.xlu0 %1092
      %1094 = vrot.lane.b32.xlu0 %v1071, 64
      %v1095 = vpop.permute.xlu0 %1094
      %1096 = vrot.lane.b32.xlu0 %v1073, 64
      %v1097 = vpop.permute.xlu0 %1096
      %1098 = vrot.lane.b32.xlu0 %v1075, 64
      %v1099 = vpop.permute.xlu0 %1098
      %1100 = vrot.lane.b32.xlu0 %v1077, 64
      %v1101 = vpop.permute.xlu0 %1100
      %1102 = vrot.lane.b32.xlu0 %v1079, 64
      %v1103 = vpop.permute.xlu0 %1102
      %vm1112 = vcmask 589312
      %1113 = vst.msk [vmem:[#allocation3] sm:$0xff] %vm1112, %v1089
      %1114 = vst.msk [vmem:[#allocation3 + $0x8] sm:$0xff] %vm1112, %v1091
      %1115 = vst.msk [vmem:[#allocation3 + $0x10] sm:$0xff] %vm1112, %v1093
      %1116 = vst.msk [vmem:[#allocation3 + $0x18] sm:$0xff] %vm1112, %v1095
      %1117 = vst.msk [vmem:[#allocation3 + $0x20] sm:$0xff] %vm1112, %v1097
      %1118 = vst.msk [vmem:[#allocation3 + $0x28] sm:$0xff] %vm1112, %v1099
      %1119 = vst.msk [vmem:[#allocation3 + $0x30] sm:$0xff] %vm1112, %v1101
      %1120 = vst.msk [vmem:[#allocation3 + $0x38] sm:$0xff] %vm1112, %v1103
      %v1121 = vld [vmem:[#allocation3] sm:$0xff]
      %v1122 = vld [vmem:[#allocation3 + $0x8] sm:$0xff]
      %v1123 = vld [vmem:[#allocation3 + $0x10] sm:$0xff]
      %v1124 = vld [vmem:[#allocation3 + $0x18] sm:$0xff]
      %v1125 = vld [vmem:[#allocation3 + $0x20] sm:$0xff]
      %v1126 = vld [vmem:[#allocation3 + $0x28] sm:$0xff]
      %v1127 = vld [vmem:[#allocation3 + $0x30] sm:$0xff]
      %v1128 = vld [vmem:[#allocation3 + $0x38] sm:$0xff]
      %v1129 = vpack.c.bf16 %v1122, %v1121
      %v1130 = vpack.c.bf16 %v1124, %v1123
      %v1131 = vpack.c.bf16 %v1126, %v1125
      %v1132 = vpack.c.bf16 %v1128, %v1127
      %v1133 = vld [vmem:[%s3] sm:$0xf]
      %v1134 = vld [vmem:[%s3 + $0x4] sm:$0xf]
      %v1135 = vld [vmem:[%s3 + $0x8] sm:$0xf]
      %v1136 = vld [vmem:[%s3 + $0xc] sm:$0xf]
      %v1137 = vld [vmem:[%s3 + $0x10] sm:$0xf]
      %v1138 = vld [vmem:[%s3 + $0x14] sm:$0xf]
      %v1139 = vld [vmem:[%s3 + $0x18] sm:$0xf]
      %v1140 = vld [vmem:[%s3 + $0x1c] sm:$0xf]
      %v1141 = vld [vmem:[%s3 + $0x20] sm:$0xf]
      %v1142 = vld [vmem:[%s4] sm:$0x1]
      %v1144 = vperm.slane %v1142, 0
      %v1155 = vunpack.c.l.b16 %v1133
      %v1156 = vunpack.c.l.b16 %v1134
      %v1157 = vunpack.c.l.b16 %v1135
      %v1158 = vunpack.c.l.b16 %v1136
      %v1159 = vunpack.c.l.b16 %v1137
      %v1160 = vunpack.c.l.b16 %v1138
      %v1161 = vunpack.c.l.b16 %v1139
      %v1162 = vunpack.c.l.b16 %v1140
      %v1163 = vunpack.c.l.b16 %v1141
      %v1164 = vpack.c.b16 %v1156, %v1155
      %v1165 = vpack.c.b16 %v1158, %v1157
      %v1166 = vpack.c.b16 %v1160, %v1159
      %v1167 = vpack.c.b16 %v1162, %v1161
      %v1168 = vpack.c.b16 %v1163, %v1163
      %vm1173 = vcmask 588800
      %v1175 = vsel %vm1173, %v1129, 0
      %v1178 = vsel %vm1173, %v1130, 0
      %v1181 = vsel %vm1173, %v1131, 0
      %v1184 = vsel %vm1173, %v1132, 0
      %vm1186 = vcmask 1043456
      %v1188 = vsel %vm1186, %v1168, 0
      %1190 = vmatpush.bf16.msra.mxu0 0
      %1191 = vmatpush.bf16.msra.mxu0 0
      %1192 = vmatpush.bf16.msra.mxu0 0
      %1193 = vmatpush.bf16.msra.mxu0 %v1188
      %1194 = vmatpush.bf16.msra.mxu0 %v1167
      %1195 = vmatpush.bf16.msra.mxu0 %v1166
      %1196 = vmatpush.bf16.msra.mxu0 %v1165
      %1197 = vmatpush.bf16.msra.mxu0 %v1164
      %1198 = vmatmul.bf16.gmra.mxu0 %v1175
      %v1199 = vpop.f32.mrf.mxu0
      %v1200 = vadd.f32 %v1144, %v1199
      %v1201 = vpop.f32.mrf.mxu0
      %v1202 = vadd.f32 %v1144, %v1201
      %1203 = vmatmul.bf16.gmra.mxu0 %v1178
      %v1204 = vpop.f32.mrf.mxu0
      %v1205 = vadd.f32 %v1144, %v1204
      %v1206 = vpop.f32.mrf.mxu0
      %v1207 = vadd.f32 %v1144, %v1206
      %1208 = vmatmul.bf16.gmra.mxu0 %v1181
      %v1209 = vpop.f32.mrf.mxu0
      %v1210 = vadd.f32 %v1144, %v1209
      %v1211 = vpop.f32.mrf.mxu0
      %v1212 = vadd.f32 %v1144, %v1211
      %1213 = vmatmul.bf16.gmra.mxu0 %v1184
      %v1214 = vpop.f32.mrf.mxu0
      %v1215 = vadd.f32 %v1144, %v1214
      %v1216 = vpop.f32.mrf.mxu0
      %v1217 = vadd.f32 %v1144, %v1216
      %1218 = vdwg.mxu0
      %v1219 = vmax.f32 %v1200, 0.0
      %v1220 = vmax.f32 %v1202, 0.0
      %v1221 = vmax.f32 %v1205, 0.0
      %v1222 = vmax.f32 %v1207, 0.0
      %v1223 = vmax.f32 %v1210, 0.0
      %v1224 = vmax.f32 %v1212, 0.0
      %v1225 = vmax.f32 %v1215, 0.0
      %v1226 = vmax.f32 %v1217, 0.0
      %v1227 = vld [vmem:[%s327] ss:$2 sm:$0xff]
      %s1228 = scalar_lea.vmem %s327, 32
      %v1229 = vld [vmem:[%s1228] ss:$2 sm:$0xff]
      %s1230 = scalar_lea.vmem %s327, 64
      %v1231 = vld [vmem:[%s1230] ss:$2 sm:$0xff]
      %s1232 = scalar_lea.vmem %s327, 96
      %v1233 = vld [vmem:[%s1232] ss:$2 sm:$0xff]
      %s1234 = scalar_lea.vmem %s327, 128
      %v1235 = vld [vmem:[%s1234] ss:$2 sm:$0xff]
      %s1236 = scalar_lea.vmem %s327, 160
      %v1237 = vld [vmem:[%s1236] ss:$2 sm:$0xff]
      %s1238 = scalar_lea.vmem %s327, 192
      %v1239 = vld [vmem:[%s1238] ss:$2 sm:$0xff]
      %s1240 = scalar_lea.vmem %s327, 224
      %v1241 = vld [vmem:[%s1240] ss:$2 sm:$0xff]
      %v1242 = vpack.c.bf16 %v1229, %v1227
      %v1243 = vpack.c.bf16 %v1233, %v1231
      %v1244 = vpack.c.bf16 %v1237, %v1235
      %v1245 = vpack.c.bf16 %v1241, %v1239
      %v1246 = vld [vmem:[%s7] sm:$0xf]
      %v1247 = vld [vmem:[%s7 + $0x4] sm:$0xf]
      %v1248 = vld [vmem:[%s8] sm:$0x1]
      %v1250 = vperm.slane %v1248, 0
      %v1254 = vunpack.c.l.b16 %v1246
      %v1255 = vunpack.c.l.b16 %v1247
      %v1256 = vpack.c.b16 %v1255, %v1254
      %v1259 = vsel %vm394, %v1242, 0
      %v1262 = vsel %vm394, %v1243, 0
      %v1265 = vsel %vm394, %v1244, 0
      %v1268 = vsel %vm394, %v1245, 0
      %1270 = vmatpush.bf16.msra.mxu0 0
      %1271 = vmatpush.bf16.msra.mxu0 0
      %1272 = vmatpush.bf16.msra.mxu0 0
      %1273 = vmatpush.bf16.msra.mxu0 0
      %1274 = vmatpush.bf16.msra.mxu0 0
      %1275 = vmatpush.bf16.msra.mxu0 0
      %1276 = vmatpush.bf16.msra.mxu0 0
      %1277 = vmatpush.bf16.msra.mxu0 %v1256
      %1278 = vmatmul.bf16.gmra.mxu0 %v1259
      %v1279 = vpop.f32.mrf.mxu0
      %v1280 = vadd.f32 %v1250, %v1279
      %v1281 = vpop.f32.mrf.mxu0
      %v1282 = vadd.f32 %v1250, %v1281
      %1283 = vmatmul.bf16.gmra.mxu0 %v1262
      %v1284 = vpop.f32.mrf.mxu0
      %v1285 = vadd.f32 %v1250, %v1284
      %v1286 = vpop.f32.mrf.mxu0
      %v1287 = vadd.f32 %v1250, %v1286
      %1288 = vmatmul.bf16.gmra.mxu0 %v1265
      %v1289 = vpop.f32.mrf.mxu0
      %v1290 = vadd.f32 %v1250, %v1289
      %v1291 = vpop.f32.mrf.mxu0
      %v1292 = vadd.f32 %v1250, %v1291
      %1293 = vmatmul.bf16.gmra.mxu0 %v1268
      %v1294 = vpop.f32.mrf.mxu0
      %v1295 = vadd.f32 %v1250, %v1294
      %v1296 = vpop.f32.mrf.mxu0
      %v1297 = vadd.f32 %v1250, %v1296
      %1298 = vdwg.mxu0
      %v1299 = vpack.c.bf16 %v1220, %v1219
      %v1300 = vpack.c.bf16 %v1222, %v1221
      %v1301 = vpack.c.bf16 %v1224, %v1223
      %v1302 = vpack.c.bf16 %v1226, %v1225
      %v1303 = vld [vmem:[%s5] sm:$0xf]
      %v1304 = vld [vmem:[%s6] sm:$0x1]
      %v1306 = vperm.slane %v1304, 0
      %v1309 = vsel %vm564, %v1299, 0
      %v1312 = vsel %vm564, %v1300, 0
      %v1315 = vsel %vm564, %v1301, 0
      %v1318 = vsel %vm564, %v1302, 0
      %v1321 = vsel %vm1186, %v1303, 0
      %1323 = vmatpush.bf16.msra.mxu0 0
      %1324 = vmatpush.bf16.msra.mxu0 0
      %1325 = vmatpush.bf16.msra.mxu0 0
      %1326 = vmatpush.bf16.msra.mxu0 0
      %1327 = vmatpush.bf16.msra.mxu0 0
      %1328 = vmatpush.bf16.msra.mxu0 0
      %1329 = vmatpush.bf16.msra.mxu0 0
      %1330 = vmatpush.bf16.msra.mxu0 %v1321
      %1331 = vmatmul.bf16.gmra.mxu0 %v1309
      %v1332 = vpop.f32.mrf.mxu0
      %v1333 = vadd.f32 %v1306, %v1332
      %v1334 = vpop.f32.mrf.mxu0
      %v1335 = vadd.f32 %v1306, %v1334
      %1336 = vmatmul.bf16.gmra.mxu0 %v1312
      %v1337 = vpop.f32.mrf.mxu0
      %v1338 = vadd.f32 %v1306, %v1337
      %v1339 = vpop.f32.mrf.mxu0
      %v1340 = vadd.f32 %v1306, %v1339
      %1341 = vmatmul.bf16.gmra.mxu0 %v1315
      %v1342 = vpop.f32.mrf.mxu0
      %v1343 = vadd.f32 %v1306, %v1342
      %v1344 = vpop.f32.mrf.mxu0
      %v1345 = vadd.f32 %v1306, %v1344
      %1346 = vmatmul.bf16.gmra.mxu0 %v1318
      %v1347 = vpop.f32.mrf.mxu0
      %v1348 = vadd.f32 %v1306, %v1347
      %v1349 = vpop.f32.mrf.mxu0
      %v1350 = vadd.f32 %v1306, %v1349
      %1351 = vdwg.mxu0
      %v1352 = vadd.f32 %v1333, %v1280
      %v1353 = vadd.f32 %v1335, %v1282
      %v1354 = vadd.f32 %v1338, %v1285
      %v1355 = vadd.f32 %v1340, %v1287
      %v1356 = vadd.f32 %v1343, %v1290
      %v1357 = vadd.f32 %v1345, %v1292
      %v1358 = vadd.f32 %v1348, %v1295
      %v1359 = vadd.f32 %v1350, %v1297
      %v1360 = vmax.f32 %v1352, 0.0
      %v1361 = vmax.f32 %v1353, 0.0
      %v1362 = vmax.f32 %v1354, 0.0
      %v1363 = vmax.f32 %v1355, 0.0
      %v1364 = vmax.f32 %v1356, 0.0
      %v1365 = vmax.f32 %v1357, 0.0
      %v1366 = vmax.f32 %v1358, 0.0
      %v1367 = vmax.f32 %v1359, 0.0
      %vm1368 = vcmask 261120
      %1369 = vst.msk [vmem:[#allocation4] sm:$0xff] %vm1368, %v1360
      %1370 = vst.msk [vmem:[#allocation4 + $0x8] sm:$0xff] %vm1368, %v1361
      %1371 = vst.msk [vmem:[#allocation4 + $0x10] sm:$0xff] %vm1368, %v1362
      %1372 = vst.msk [vmem:[#allocation4 + $0x18] sm:$0xff] %vm1368, %v1363
      %1373 = vst.msk [vmem:[#allocation4 + $0x20] sm:$0xff] %vm1368, %v1364
      %1374 = vst.msk [vmem:[#allocation4 + $0x28] sm:$0xff] %vm1368, %v1365
      %1375 = vst.msk [vmem:[#allocation4 + $0x30] sm:$0xff] %vm1368, %v1366
      %1376 = vst.msk [vmem:[#allocation4 + $0x38] sm:$0xff] %vm1368, %v1367
      %v1377 = vld [vmem:[#allocation4] ss:$8 sm:$0xf]
      %v1378 = vld [vmem:[#allocation4] ss:$8 sm:$0xf0]
      %v1379 = vor.u32 %v1377, %v1378
      %1380 = vst.msk [vmem:[%s332] sm:$0xff] %vm1368, %v1379
      %s1381 = scalar_lea.vmem [#allocation4], 1
      %v1382 = vld [vmem:[%s1381] ss:$8 sm:$0xf]
      %v1383 = vld [vmem:[%s1381] ss:$8 sm:$0xf0]
      %v1384 = vor.u32 %v1382, %v1383
      %1386 = vrot.lane.b32.xlu0 %v1384, 32
      %v1387 = vpop.permute.xlu0 %1386
      %vm1389 = vcmask 523520
      %1390 = vst.msk [vmem:[%s332] sm:$0xff] %vm1389, %v1387
      %s1391 = scalar_lea.vmem [#allocation4], 2
      %v1392 = vld [vmem:[%s1391] ss:$8 sm:$0xf]
      %v1393 = vld [vmem:[%s1391] ss:$8 sm:$0xf0]
      %v1394 = vor.u32 %v1392, %v1393
      %1396 = vrot.lane.b32.xlu0 %v1394, 64
      %v1397 = vpop.permute.xlu0 %1396
      %vm1399 = vcmask 785920
      %1400 = vst.msk [vmem:[%s332] sm:$0xff] %vm1399, %v1397
      %s1401 = scalar_lea.vmem [#allocation4], 3
      %v1402 = vld [vmem:[%s1401] ss:$8 sm:$0xf]
      %v1403 = vld [vmem:[%s1401] ss:$8 sm:$0xf0]
      %v1404 = vor.u32 %v1402, %v1403
      %1406 = vrot.lane.b32.xlu0 %v1404, 96
      %v1407 = vpop.permute.xlu0 %1406
      %vm1409 = vcmask 1048320
      %1410 = vst.msk [vmem:[%s332] sm:$0xff] %vm1409, %v1407
      %s1411 = scalar_lea.vmem [#allocation4], 4
      %v1412 = vld [vmem:[%s1411] ss:$8 sm:$0xf]
      %v1413 = vld [vmem:[%s1411] ss:$8 sm:$0xf0]
      %v1414 = vor.u32 %v1412, %v1413
      %1415 = vst.msk [vmem:[%s332 + $0x8] sm:$0xff] %vm1368, %v1414
      %s1416 = scalar_lea.vmem [#allocation4], 5
      %v1417 = vld [vmem:[%s1416] ss:$8 sm:$0xf]
      %v1418 = vld [vmem:[%s1416] ss:$8 sm:$0xf0]
      %v1419 = vor.u32 %v1417, %v1418
      %1421 = vrot.lane.b32.xlu0 %v1419, 32
      %v1422 = vpop.permute.xlu0 %1421
      %1424 = vst.msk [vmem:[%s332 + $0x8] sm:$0xff] %vm1389, %v1422
      %s1425 = scalar_lea.vmem [#allocation4], 6
      %v1426 = vld [vmem:[%s1425] ss:$8 sm:$0xf]
      %v1427 = vld [vmem:[%s1425] ss:$8 sm:$0xf0]
      %v1428 = vor.u32 %v1426, %v1427
      %1430 = vrot.lane.b32.xlu0 %v1428, 64
      %v1431 = vpop.permute.xlu0 %1430
      %1433 = vst.msk [vmem:[%s332 + $0x8] sm:$0xff] %vm1399, %v1431
      %s1434 = scalar_lea.vmem [#allocation4], 7
      %v1435 = vld [vmem:[%s1434] ss:$8 sm:$0xf]
      %v1436 = vld [vmem:[%s1434] ss:$8 sm:$0xf0]
      %v1437 = vor.u32 %v1435, %v1436
      %1439 = vrot.lane.b32.xlu0 %v1437, 96
      %v1440 = vpop.permute.xlu0 %1439
      %1442 = vst.msk [vmem:[%s332 + $0x8] sm:$0xff] %vm1409, %v1440
      %p1443 = scmp.lt.s32.totalorder %s20, 7
      %s1444 = scalar_select %p1443, %s20, 7
      %s1445 = smul.addr %s1444, 2
      %s1446 = smul.addr %s1445, 8
      %s1447 = scalar_lea.vmem %s9, %s1446
      // Predicated region
      $region57: #{base_block_forward.1} parent=55 // pred_check
        %p1448 = pneg %p232
      $region58: #{base_block_forward.1} parent=55 // pred_check_branch
        %1450 = sbr.rel (%p1448) target = $region60
      $region59: #{base_block_forward.1} parent=55 // pred_region
        _
      $region60: #{base_block_forward.1} parent=55 // pred_fallthru
        _
    $region56: #{base_block_forward.1} parent=5 // pred_fallthru
      _
    %p1451 = scmp.le.s32.totalorder 2, %s15
    // Predicated region
    $region61: #{base_block_forward.1} parent=5 // pred_check
      %p1452 = pneg %p1451
    $region62: #{base_block_forward.1} parent=5 // pred_check_branch
      %1454 = sbr.rel (%p1452) target = $region64
    $region63: #{base_block_forward.1} parent=5 // pred_region
      %s1455 = ssub.s32 %s15, 2
      // Predicated region
      $region65: #{base_block_forward.1} parent=63 // pred_check
        %p1456 = pneg %p238
      $region66: #{base_block_forward.1} parent=63 // pred_check_branch
        %1458 = sbr.rel (%p1456) target = $region68
      $region67: #{base_block_forward.1} parent=63 // pred_region
        %p1459 = scmp.lt.s32.totalorder %s21, 7
        %s1460 = scalar_select %p1459, %s21, 7
        %s1461 = smul.addr %s1460, 2
        %s1462 = smul.addr %s1461, 8
        %s1463 = scalar_lea.vmem %s9, %s1462
      $region68: #{base_block_forward.1} parent=63 // pred_fallthru
        _
    $region64: #{base_block_forward.1} parent=5 // pred_fallthru
      _
  $region6: #{base_block_forward.1} parent=0 // loop_footer
    %s19 = sadd.s32 1, %s15
  $region7: #{base_block_forward.1} parent=0 // loop_footer_branch
    %14 = sbr.rel target = $region3
  $region8: #{base_block_forward.1} parent=0 // loop_exit
    _

</llo_original>
